<compile_context>
chip_gen: v5e
topology: v5e:2x2
jax: 0.10.0
libtpu: 0.0.40
codegen_flags: <defaults>
</compile_context>

<pallas_src>
import jax
import jax.numpy as jnp
from jax.experimental import pallas as pl
from jax.experimental.pallas import tpu as pltpu

LEAKY_SLOPE = 0.2
BN_EPS = 1e-5
VMEM_LIMIT = 32 * 1024 * 1024    # raise v5e's 16 MiB default scoped limit
TILE_BUDGET = 12 * 1024 * 1024   # live-buffer budget used by the tile picker


# ----------------------------- Pallas kernels ------------------------------ #
def _convT_kernel(pT_ref, wT_ref, sh_ref, o_ref):
    """One conv layer, transposed (lane-dense) form.

    (Cout, tm) = W_scaled^T (Cout, K) @ patches^T (K, tm); BN scale is already
    folded into the weight, so only the shift + LeakyReLU run here.
    """
    y = jnp.dot(wT_ref[...], pT_ref[...], preferred_element_type=jnp.float32)
    y = y + sh_ref[...]
    y = jnp.where(y >= 0, y, LEAKY_SLOPE * y)
    o_ref[...] = y.astype(o_ref.dtype)


def _conv45_kernel(pT_ref, wT_ref, sh_ref, w5_ref, g_ref, feat_ref, logit_ref):
    """Fused layer4 (conv + BN + LeakyReLU) + layer5 (4x4 valid conv + sigmoid).

    The layer-4 feature tile (8f, N*16) stays on chip and the layer-5
    reduction runs as an epilogue: no extra pallas_call / HBM re-read.
    """
    y = jnp.dot(wT_ref[...], pT_ref[...], preferred_element_type=jnp.float32)
    y = y + sh_ref[...]
    y = jnp.where(y >= 0, y, LEAKY_SLOPE * y)                 # (8f, N*16)
    feat_ref[...] = y.astype(feat_ref.dtype)

    # logit[n] = sum_{c,hw} y[c, n*16+hw] * w5[c, hw]
    prod = y * w5_ref[...]                                    # (8f, N*16)
    per_n = jnp.dot(prod, g_ref[...],
                    preferred_element_type=jnp.float32)       # (8f, N)
    logits = jnp.sum(per_n, axis=0, keepdims=True)            # (1, N)
    logit_ref[...] = jax.nn.sigmoid(logits)


# ------------------------------ glue (JAX) --------------------------------- #
def _pick_tile_m(m, k, cout):
    """Largest lane tile (multiple of 128) of the M axis that fits the VMEM
    budget (double-buffered bf16 patch tile + resident weight + f32 output),
    preferring grid >= 2 so both v7x TensorCores get work."""
    best = None
    for t in (2048, 1024, 512, 256, 128):
        if m % t:
            continue
        need = 2 * (k * t * 2) + (cout * k * 2) + 2 * (cout * t * 4)
        if need <= TILE_BUDGET:
            best = t
            break
    if best is None:
        best = 128 if m % 128 == 0 else m
    if best == m and m >= 256 and (m // 2) % 128 == 0:
        best = m // 2
    return best


def _extract_patches_T(x, k, stride, pad):
    """NHWC -> transposed im2col matrix (K, M) in bf16.

    K order = (kh, kw, cin)  (matches the (Cout, kh, kw, Cin) weight reshape)
    M order = (n, ho, wo)    (lane axis of the kernel output)
    """
    n, h, w, c = x.shape
    x = x.astype(jnp.bfloat16)
    xp = jnp.pad(x, ((0, 0), (pad, pad), (pad, pad), (0, 0)))
    ho = (h + 2 * pad - k) // stride + 1
    wo = (w + 2 * pad - k) // stride + 1
    taps = []
    for di in range(k):
        for dj in range(k):
            taps.append(xp[:, di:di + stride * ho:stride,
                           dj:dj + stride * wo:stride, :])
    pat = jnp.stack(taps, axis=0)               # (k*k, n, ho, wo, c)
    pat = pat.transpose(0, 4, 1, 2, 3)          # (k*k, c, n, ho, wo)
    return pat.reshape(k * k * c, n * ho * wo), (n, ho, wo)


def _conv_layer_T(x_nhwc, w, scale, shift, *, stride, pad):
    """Conv2d(4x4, bias=False) + folded eval-BN + LeakyReLU(0.2)."""
    cout, cin, kh, kw = w.shape
    pT, (n, ho, wo) = _extract_patches_T(x_nhwc, kh, stride, pad)
    k = kh * kw * cin
    m = n * ho * wo
    wT = (w.transpose(0, 2, 3, 1).reshape(cout, k)
          * scale[:, None]).astype(jnp.bfloat16)
    tm = _pick_tile_m(m, k, cout)

    yT = pl.pallas_call(
        _convT_kernel,
        out_shape=jax.ShapeDtypeStruct((cout, m), jnp.bfloat16),
        grid_spec=pltpu.PrefetchScalarGridSpec(
            num_scalar_prefetch=0,
            grid=(m // tm,),
            in_specs=[
                pl.BlockSpec((k, tm), lambda i: (0, i)),      # patches^T tile
                pl.BlockSpec((cout, k), lambda i: (0, 0)),    # scaled weight
                pl.BlockSpec((cout, 1), lambda i: (0, 0)),    # BN shift
            ],
            out_specs=pl.BlockSpec((cout, tm), lambda i: (0, i)),
        ),
        compiler_params=pltpu.CompilerParams(
            dimension_semantics=("parallel",),
            vmem_limit_bytes=VMEM_LIMIT),
    )(pT, wT, shift.reshape(cout, 1).astype(jnp.float32))

    # back to NHWC for the next layer's patch extraction
    return yT.reshape(cout, n, ho, wo).transpose(1, 2, 3, 0)


def _conv45(x_nhwc, w4, scale4, shift4, w5):
    """Fused layer4 (+BN+LeakyReLU) and layer5 (4x4 valid conv + sigmoid)."""
    cout, cin, kh, kw = w4.shape
    pT, (n, ho, wo) = _extract_patches_T(x_nhwc, kh, 2, 1)
    assert (ho, wo) == (4, 4), "layer5's 4x4 valid conv requires a 64x64 input"
    k = kh * kw * cin
    m = n * ho * wo
    hw = ho * wo

    w4T = (w4.transpose(0, 2, 3, 1).reshape(cout, k)
           * scale4[:, None]).astype(jnp.bfloat16)
    # layer5 weight aligned to the (n, ho, wo) column order of the feature tile
    w5mat = w5.reshape(1, cout, hw)[0]                          # (8f, 16)
    w5big = jnp.tile(w5mat, (1, n)).astype(jnp.float32)         # (8f, n*16)
    gmat = (jnp.arange(m)[:, None] // hw
            == jnp.arange(n)[None, :]).astype(jnp.float32)      # (n*16, n)

    feat_T, logits = pl.pallas_call(
        _conv45_kernel,
        out_shape=(jax.ShapeDtypeStruct((cout, m), jnp.float32),
                   jax.ShapeDtypeStruct((1, n), jnp.float32)),
        grid_spec=pltpu.PrefetchScalarGridSpec(
            num_scalar_prefetch=0,
            grid=(1,),
            in_specs=[
                pl.BlockSpec((k, m), lambda i: (0, 0)),
                pl.BlockSpec((cout, k), lambda i: (0, 0)),
                pl.BlockSpec((cout, 1), lambda i: (0, 0)),
                pl.BlockSpec((cout, m), lambda i: (0, 0)),
                pl.BlockSpec((m, n), lambda i: (0, 0)),
            ],
            out_specs=[pl.BlockSpec((cout, m), lambda i: (0, 0)),
                       pl.BlockSpec((1, n), lambda i: (0, 0))],
        ),
        compiler_params=pltpu.CompilerParams(
            dimension_semantics=("arbitrary",),
            vmem_limit_bytes=VMEM_LIMIT),
    )(pT, w4T, shift4.reshape(cout, 1).astype(jnp.float32), w5big, gmat)

    feature = feat_T.reshape(cout, n, ho, wo).transpose(1, 0, 2, 3)  # NCHW
    return logits.reshape(-1), feature


def init_params(key, num_feature_maps, num_channels):
    f, c = num_feature_maps, num_channels
    shapes = [
        (f, c, 4, 4),
        (2 * f, f, 4, 4),
        (4 * f, 2 * f, 4, 4),
        (8 * f, 4 * f, 4, 4),
        (1, 8 * f, 4, 4),
    ]
    keys = jax.random.split(key, len(shapes))
    weights = [0.02 * jax.random.normal(k, s, jnp.float32)
               for k, s in zip(keys, shapes)]
    # BatchNorm2d (layers 2-4), fresh PyTorch init: gamma=1, beta=0,
    # running_mean=0, running_var=1; eval-mode BN folds to a per-channel affine.
    bn = []
    for co in (2 * f, 4 * f, 8 * f):
        gamma = jnp.ones((co,), jnp.float32)
        beta = jnp.zeros((co,), jnp.float32)
        r_mean = jnp.zeros((co,), jnp.float32)
        r_var = jnp.ones((co,), jnp.float32)
        scale = gamma / jnp.sqrt(r_var + BN_EPS)
        shift = beta - r_mean * scale
        bn.append((scale, shift))
    return {"weights": weights, "bn": bn}


def discriminator_forward(x_nchw, params):
    w1, w2, w3, w4, w5 = params["weights"]
    (s2, b2), (s3, b3), (s4, b4) = params["bn"]

    x = jnp.transpose(x_nchw, (0, 2, 3, 1))          # NCHW -> NHWC
    ones = jnp.ones((w1.shape[0],), jnp.float32)     # layer1 has no BN
    zeros = jnp.zeros((w1.shape[0],), jnp.float32)

    # Dropout2d(dropout_rate=0) layers are identities (p=0 / inference).
    out = _conv_layer_T(x,   w1, ones, zeros, stride=2, pad=1)
    out = _conv_layer_T(out, w2, s2, b2, stride=2, pad=1)
    out = _conv_layer_T(out, w3, s3, b3, stride=2, pad=1)
    logits, feature = _conv45(out, w4, s4, b4, w5)
    return logits, feature                            # (N,), (N, 8f, 4, 4)


if __name__ == "__main__":
    num_feature_maps = 8
    num_channels = 3
    batch = 2
    spatial = 64  # architecture requires 64x64 so layer5's 4x4 valid conv -> 1x1

    key = jax.random.PRNGKey(0)
    pkey, xkey = jax.random.split(key)
    params = init_params(pkey, num_feature_maps, num_channels)
    x = jax.random.normal(xkey, (batch, num_channels, spatial, spatial),
                          jnp.float32)

    fwd = jax.jit(discriminator_forward)
    out, feature = fwd(x, params)
    jax.block_until_ready((out, feature))

    assert out.shape == (batch,)
    assert feature.shape == (batch, 8 * num_feature_maps, 4, 4)
    assert bool(jnp.all(jnp.isfinite(out)))
    assert bool(jnp.all((out >= 0.0) & (out <= 1.0)))
    assert bool(jnp.all(jnp.isfinite(feature)))
    print("KERNEL_OK")
</pallas_src>

<mosaic_0001>
module attributes {stable_mosaic.version = 11 : i64} {
  func.func @_convT_kernel(%arg0: i32, %arg1: memref<48x1024xbf16, #tpu.memory_space<vmem>>, %arg2: memref<8x48xbf16, #tpu.memory_space<vmem>>, %arg3: memref<8x1xf32, #tpu.memory_space<vmem>>, %arg4: memref<8x1024xbf16, #tpu.memory_space<vmem>>) attributes {dimension_semantics = [#tpu.dimension_semantics<parallel>], iteration_bounds = array<i64: 2>, scalar_prefetch = 0 : i64, scratch_operands = 0 : i64, tpu.core_type = #tpu.core_type<tc>, window_params = [{transform_indices = @transform_0, window_bounds = array<i64: 48, 1024>}, {pipeline_mode = #tpu.pipeline_mode<synchronous>, transform_indices = @transform_1, window_bounds = array<i64: 8, 48>}, {pipeline_mode = #tpu.pipeline_mode<synchronous>, transform_indices = @transform_2, window_bounds = array<i64: 8, 1>}, {transform_indices = @transform_3, window_bounds = array<i64: 8, 1024>}]} {
    %c0 = arith.constant 0 : index
    %c0_0 = arith.constant 0 : index
    %0 = vector.load %arg2[%c0, %c0_0] : memref<8x48xbf16, #tpu.memory_space<vmem>>, vector<8x48xbf16>
    %c0_1 = arith.constant 0 : index
    %c0_2 = arith.constant 0 : index
    %1 = vector.load %arg1[%c0_1, %c0_2] : memref<48x1024xbf16, #tpu.memory_space<vmem>>, vector<48x1024xbf16>
    %cst = arith.constant dense<0.000000e+00> : vector<8x1024xf32>
    %2 = tpu.matmul %0, %1, %cst {dimension_numbers = #tpu.dot_dimension_numbers<[1], [0], [0], [1], [0, 0, 1, 1], [], []>} : vector<8x48xbf16>, vector<48x1024xbf16>, vector<8x1024xf32> -> vector<8x1024xf32>
    %c0_3 = arith.constant 0 : index
    %c0_4 = arith.constant 0 : index
    %3 = vector.load %arg3[%c0_3, %c0_4] : memref<8x1xf32, #tpu.memory_space<vmem>>, vector<8x1xf32>
    %4 = vector.broadcast %3 : vector<8x1xf32> to vector<8x1024xf32>
    %5 = arith.addf %2, %4 : vector<8x1024xf32>
    %cst_5 = arith.constant 0.000000e+00 : f32
    %6 = vector.broadcast %cst_5 : f32 to vector<8x1024xf32>
    %7 = arith.cmpf oge, %5, %6 : vector<8x1024xf32>
    %cst_6 = arith.constant 2.000000e-01 : f32
    %8 = vector.broadcast %cst_6 : f32 to vector<8x1024xf32>
    %9 = arith.mulf %8, %5 : vector<8x1024xf32>
    %10 = arith.select %7, %5, %9 : vector<8x1024xi1>, vector<8x1024xf32>
    %11 = arith.truncf %10 : vector<8x1024xf32> to vector<8x1024xbf16>
    %c0_7 = arith.constant 0 : index
    %c0_8 = arith.constant 0 : index
    %12 = vector.load %arg4[%c0_7, %c0_8] : memref<8x1024xbf16, #tpu.memory_space<vmem>>, vector<8x1024xbf16>
    tpu.vector_store %arg4[%c0_7, %c0_8], %11 {strides = array<i32>} : memref<8x1024xbf16, #tpu.memory_space<vmem>>, vector<8x1024xbf16>,
    return
  }
  func.func @transform_0(%arg0: i32) -> (i32, i32) {
    %c0_i32 = arith.constant 0 : i32
    %c0_i32_0 = arith.constant 0 : i32
    return %c0_i32, %arg0 : i32, i32
  }
  func.func @transform_1(%arg0: i32) -> (i32, i32) {
    %c0_i32 = arith.constant 0 : i32
    %c0_i32_0 = arith.constant 0 : i32
    %c0_i32_1 = arith.constant 0 : i32
    return %c0_i32, %c0_i32_0 : i32, i32
  }
  func.func @transform_2(%arg0: i32) -> (i32, i32) {
    %c0_i32 = arith.constant 0 : i32
    %c0_i32_0 = arith.constant 0 : i32
    %c0_i32_1 = arith.constant 0 : i32
    return %c0_i32, %c0_i32_0 : i32, i32
  }
  func.func @transform_3(%arg0: i32) -> (i32, i32) {
    %c0_i32 = arith.constant 0 : i32
    %c0_i32_0 = arith.constant 0 : i32
    return %c0_i32, %arg0 : i32, i32
  }
}

module attributes {stable_mosaic.version = 11 : i64} {
  func.func @_convT_kernel(%arg0: i32, %arg1: memref<128x256xbf16, #tpu.memory_space<vmem>>, %arg2: memref<16x128xbf16, #tpu.memory_space<vmem>>, %arg3: memref<16x1xf32, #tpu.memory_space<vmem>>, %arg4: memref<16x256xbf16, #tpu.memory_space<vmem>>) attributes {dimension_semantics = [#tpu.dimension_semantics<parallel>], iteration_bounds = array<i64: 2>, scalar_prefetch = 0 : i64, scratch_operands = 0 : i64, tpu.core_type = #tpu.core_type<tc>, window_params = [{transform_indices = @transform_0, window_bounds = array<i64: 128, 256>}, {pipeline_mode = #tpu.pipeline_mode<synchronous>, transform_indices = @transform_1, window_bounds = array<i64: 16, 128>}, {pipeline_mode = #tpu.pipeline_mode<synchronous>, transform_indices = @transform_2, window_bounds = array<i64: 16, 1>}, {transform_indices = @transform_3, window_bounds = array<i64: 16, 256>}]} {
    %c0 = arith.constant 0 : index
    %c0_0 = arith.constant 0 : index
    %0 = vector.load %arg2[%c0, %c0_0] : memref<16x128xbf16, #tpu.memory_space<vmem>>, vector<16x128xbf16>
    %c0_1 = arith.constant 0 : index
    %c0_2 = arith.constant 0 : index
    %1 = vector.load %arg1[%c0_1, %c0_2] : memref<128x256xbf16, #tpu.memory_space<vmem>>, vector<128x256xbf16>
    %cst = arith.constant dense<0.000000e+00> : vector<16x256xf32>
    %2 = tpu.matmul %0, %1, %cst {dimension_numbers = #tpu.dot_dimension_numbers<[1], [0], [0], [1], [0, 0, 1, 1], [], []>} : vector<16x128xbf16>, vector<128x256xbf16>, vector<16x256xf32> -> vector<16x256xf32>
    %c0_3 = arith.constant 0 : index
    %c0_4 = arith.constant 0 : index
    %3 = vector.load %arg3[%c0_3, %c0_4] : memref<16x1xf32, #tpu.memory_space<vmem>>, vector<16x1xf32>
    %4 = vector.broadcast %3 : vector<16x1xf32> to vector<16x256xf32>
    %5 = arith.addf %2, %4 : vector<16x256xf32>
    %cst_5 = arith.constant 0.000000e+00 : f32
    %6 = vector.broadcast %cst_5 : f32 to vector<16x256xf32>
    %7 = arith.cmpf oge, %5, %6 : vector<16x256xf32>
    %cst_6 = arith.constant 2.000000e-01 : f32
    %8 = vector.broadcast %cst_6 : f32 to vector<16x256xf32>
    %9 = arith.mulf %8, %5 : vector<16x256xf32>
    %10 = arith.select %7, %5, %9 : vector<16x256xi1>, vector<16x256xf32>
    %11 = arith.truncf %10 : vector<16x256xf32> to vector<16x256xbf16>
    %c0_7 = arith.constant 0 : index
    %c0_8 = arith.constant 0 : index
    %12 = vector.load %arg4[%c0_7, %c0_8] : memref<16x256xbf16, #tpu.memory_space<vmem>>, vector<16x256xbf16>
    tpu.vector_store %arg4[%c0_7, %c0_8], %11 {strides = array<i32>} : memref<16x256xbf16, #tpu.memory_space<vmem>>, vector<16x256xbf16>,
    return
  }
  func.func @transform_0(%arg0: i32) -> (i32, i32) {
    %c0_i32 = arith.constant 0 : i32
    %c0_i32_0 = arith.constant 0 : i32
    return %c0_i32, %arg0 : i32, i32
  }
  func.func @transform_1(%arg0: i32) -> (i32, i32) {
    %c0_i32 = arith.constant 0 : i32
    %c0_i32_0 = arith.constant 0 : i32
    %c0_i32_1 = arith.constant 0 : i32
    return %c0_i32, %c0_i32_0 : i32, i32
  }
  func.func @transform_2(%arg0: i32) -> (i32, i32) {
    %c0_i32 = arith.constant 0 : i32
    %c0_i32_0 = arith.constant 0 : i32
    %c0_i32_1 = arith.constant 0 : i32
    return %c0_i32, %c0_i32_0 : i32, i32
  }
  func.func @transform_3(%arg0: i32) -> (i32, i32) {
    %c0_i32 = arith.constant 0 : i32
    %c0_i32_0 = arith.constant 0 : i32
    return %c0_i32, %arg0 : i32, i32
  }
}

module attributes {stable_mosaic.version = 11 : i64} {
  func.func @_convT_kernel(%arg0: i32, %arg1: memref<256x128xbf16, #tpu.memory_space<vmem>>, %arg2: memref<32x256xbf16, #tpu.memory_space<vmem>>, %arg3: memref<32x1xf32, #tpu.memory_space<vmem>>, %arg4: memref<32x128xbf16, #tpu.memory_space<vmem>>) attributes {dimension_semantics = [#tpu.dimension_semantics<parallel>], iteration_bounds = array<i64: 1>, scalar_prefetch = 0 : i64, scratch_operands = 0 : i64, tpu.core_type = #tpu.core_type<tc>, window_params = [{transform_indices = @transform_0, window_bounds = array<i64: 256, 128>}, {pipeline_mode = #tpu.pipeline_mode<synchronous>, transform_indices = @transform_1, window_bounds = array<i64: 32, 256>}, {pipeline_mode = #tpu.pipeline_mode<synchronous>, transform_indices = @transform_2, window_bounds = array<i64: 32, 1>}, {transform_indices = @transform_3, window_bounds = array<i64: 32, 128>}]} {
    %c0 = arith.constant 0 : index
    %c0_0 = arith.constant 0 : index
    %0 = vector.load %arg2[%c0, %c0_0] : memref<32x256xbf16, #tpu.memory_space<vmem>>, vector<32x256xbf16>
    %c0_1 = arith.constant 0 : index
    %c0_2 = arith.constant 0 : index
    %1 = vector.load %arg1[%c0_1, %c0_2] : memref<256x128xbf16, #tpu.memory_space<vmem>>, vector<256x128xbf16>
    %cst = arith.constant dense<0.000000e+00> : vector<32x128xf32>
    %2 = tpu.matmul %0, %1, %cst {dimension_numbers = #tpu.dot_dimension_numbers<[1], [0], [0], [1], [0, 0, 1, 1], [], []>} : vector<32x256xbf16>, vector<256x128xbf16>, vector<32x128xf32> -> vector<32x128xf32>
    %c0_3 = arith.constant 0 : index
    %c0_4 = arith.constant 0 : index
    %3 = vector.load %arg3[%c0_3, %c0_4] : memref<32x1xf32, #tpu.memory_space<vmem>>, vector<32x1xf32>
    %4 = vector.broadcast %3 : vector<32x1xf32> to vector<32x128xf32>
    %5 = arith.addf %2, %4 : vector<32x128xf32>
    %cst_5 = arith.constant 0.000000e+00 : f32
    %6 = vector.broadcast %cst_5 : f32 to vector<32x128xf32>
    %7 = arith.cmpf oge, %5, %6 : vector<32x128xf32>
    %cst_6 = arith.constant 2.000000e-01 : f32
    %8 = vector.broadcast %cst_6 : f32 to vector<32x128xf32>
    %9 = arith.mulf %8, %5 : vector<32x128xf32>
    %10 = arith.select %7, %5, %9 : vector<32x128xi1>, vector<32x128xf32>
    %11 = arith.truncf %10 : vector<32x128xf32> to vector<32x128xbf16>
    %c0_7 = arith.constant 0 : index
    %c0_8 = arith.constant 0 : index
    %12 = vector.load %arg4[%c0_7, %c0_8] : memref<32x128xbf16, #tpu.memory_space<vmem>>, vector<32x128xbf16>
    tpu.vector_store %arg4[%c0_7, %c0_8], %11 {strides = array<i32>} : memref<32x128xbf16, #tpu.memory_space<vmem>>, vector<32x128xbf16>,
    return
  }
  func.func @transform_0(%arg0: i32) -> (i32, i32) {
    %c0_i32 = arith.constant 0 : i32
    %c0_i32_0 = arith.constant 0 : i32
    return %c0_i32, %arg0 : i32, i32
  }
  func.func @transform_1(%arg0: i32) -> (i32, i32) {
    %c0_i32 = arith.constant 0 : i32
    %c0_i32_0 = arith.constant 0 : i32
    %c0_i32_1 = arith.constant 0 : i32
    return %c0_i32, %c0_i32_0 : i32, i32
  }
  func.func @transform_2(%arg0: i32) -> (i32, i32) {
    %c0_i32 = arith.constant 0 : i32
    %c0_i32_0 = arith.constant 0 : i32
    %c0_i32_1 = arith.constant 0 : i32
    return %c0_i32, %c0_i32_0 : i32, i32
  }
  func.func @transform_3(%arg0: i32) -> (i32, i32) {
    %c0_i32 = arith.constant 0 : i32
    %c0_i32_0 = arith.constant 0 : i32
    return %c0_i32, %arg0 : i32, i32
  }
}

module attributes {stable_mosaic.version = 11 : i64} {
  func.func @_conv45_kernel(%arg0: i32, %arg1: memref<512x32xbf16, #tpu.memory_space<vmem>>, %arg2: memref<64x512xbf16, #tpu.memory_space<vmem>>, %arg3: memref<64x1xf32, #tpu.memory_space<vmem>>, %arg4: memref<64x32xf32, #tpu.memory_space<vmem>>, %arg5: memref<32x2xf32, #tpu.memory_space<vmem>>, %arg6: memref<64x32xf32, #tpu.memory_space<vmem>>, %arg7: memref<1x2xf32, #tpu.memory_space<vmem>>) attributes {dimension_semantics = [#tpu.dimension_semantics<arbitrary>], iteration_bounds = array<i64: 1>, scalar_prefetch = 0 : i64, scratch_operands = 0 : i64, tpu.core_type = #tpu.core_type<tc>, window_params = [{pipeline_mode = #tpu.pipeline_mode<synchronous>, transform_indices = @transform_0, window_bounds = array<i64: 512, 32>}, {pipeline_mode = #tpu.pipeline_mode<synchronous>, transform_indices = @transform_1, window_bounds = array<i64: 64, 512>}, {pipeline_mode = #tpu.pipeline_mode<synchronous>, transform_indices = @transform_2, window_bounds = array<i64: 64, 1>}, {pipeline_mode = #tpu.pipeline_mode<synchronous>, transform_indices = @transform_3, window_bounds = array<i64: 64, 32>}, {pipeline_mode = #tpu.pipeline_mode<synchronous>, transform_indices = @transform_4, window_bounds = array<i64: 32, 2>}, {pipeline_mode = #tpu.pipeline_mode<synchronous>, transform_indices = @transform_5, window_bounds = array<i64: 64, 32>}, {pipeline_mode = #tpu.pipeline_mode<synchronous>, transform_indices = @transform_6, window_bounds = array<i64: 1, 2>}]} {
    %c0 = arith.constant 0 : index
    %c0_0 = arith.constant 0 : index
    %0 = vector.load %arg2[%c0, %c0_0] : memref<64x512xbf16, #tpu.memory_space<vmem>>, vector<64x512xbf16>
    %c0_1 = arith.constant 0 : index
    %c0_2 = arith.constant 0 : index
    %1 = vector.load %arg1[%c0_1, %c0_2] : memref<512x32xbf16, #tpu.memory_space<vmem>>, vector<512x32xbf16>
    %cst = arith.constant dense<0.000000e+00> : vector<64x32xf32>
    %2 = tpu.matmul %0, %1, %cst {dimension_numbers = #tpu.dot_dimension_numbers<[1], [0], [0], [1], [0, 0, 1, 1], [], []>} : vector<64x512xbf16>, vector<512x32xbf16>, vector<64x32xf32> -> vector<64x32xf32>
    %c0_3 = arith.constant 0 : index
    %c0_4 = arith.constant 0 : index
    %3 = vector.load %arg3[%c0_3, %c0_4] : memref<64x1xf32, #tpu.memory_space<vmem>>, vector<64x1xf32>
    %4 = vector.broadcast %3 : vector<64x1xf32> to vector<64x32xf32>
    %5 = arith.addf %2, %4 : vector<64x32xf32>
    %cst_5 = arith.constant 0.000000e+00 : f32
    %6 = vector.broadcast %cst_5 : f32 to vector<64x32xf32>
    %7 = arith.cmpf oge, %5, %6 : vector<64x32xf32>
    %cst_6 = arith.constant 2.000000e-01 : f32
    %8 = vector.broadcast %cst_6 : f32 to vector<64x32xf32>
    %9 = arith.mulf %8, %5 : vector<64x32xf32>
    %10 = arith.select %7, %5, %9 : vector<64x32xi1>, vector<64x32xf32>
    %c0_7 = arith.constant 0 : index
    %c0_8 = arith.constant 0 : index
    %11 = vector.load %arg6[%c0_7, %c0_8] : memref<64x32xf32, #tpu.memory_space<vmem>>, vector<64x32xf32>
    tpu.vector_store %arg6[%c0_7, %c0_8], %10 {strides = array<i32>} : memref<64x32xf32, #tpu.memory_space<vmem>>, vector<64x32xf32>,
    %c0_9 = arith.constant 0 : index
    %c0_10 = arith.constant 0 : index
    %12 = vector.load %arg4[%c0_9, %c0_10] : memref<64x32xf32, #tpu.memory_space<vmem>>, vector<64x32xf32>
    %13 = arith.mulf %10, %12 : vector<64x32xf32>
    %c0_11 = arith.constant 0 : index
    %c0_12 = arith.constant 0 : index
    %14 = vector.load %arg5[%c0_11, %c0_12] : memref<32x2xf32, #tpu.memory_space<vmem>>, vector<32x2xf32>
    %cst_13 = arith.constant dense<0.000000e+00> : vector<64x2xf32>
    %15 = tpu.matmul %13, %14, %cst_13 {dimension_numbers = #tpu.dot_dimension_numbers<[1], [0], [0], [1], [0, 0, 1, 1], [], []>} : vector<64x32xf32>, vector<32x2xf32>, vector<64x2xf32> -> vector<64x2xf32>
    %cst_14 = arith.constant dense<0.000000e+00> : vector<2xf32>
    %16 = vector.multi_reduction <add>, %15, %cst_14 [0] : vector<64x2xf32> to vector<2xf32>
    %17 = vector.shape_cast %16 : vector<2xf32> to vector<1x2xf32>
    %18 = arith.negf %17 : vector<1x2xf32>
    %19 = math.exp %18 : vector<1x2xf32>
    %cst_15 = arith.constant 1.000000e+00 : f32
    %20 = vector.broadcast %cst_15 : f32 to vector<1x2xf32>
    %21 = arith.addf %20, %19 : vector<1x2xf32>
    %22 = arith.divf %20, %21 : vector<1x2xf32>
    %c0_16 = arith.constant 0 : index
    %c0_17 = arith.constant 0 : index
    %23 = vector.load %arg7[%c0_16, %c0_17] : memref<1x2xf32, #tpu.memory_space<vmem>>, vector<1x2xf32>
    tpu.vector_store %arg7[%c0_16, %c0_17], %22 {strides = array<i32>} : memref<1x2xf32, #tpu.memory_space<vmem>>, vector<1x2xf32>,
    return
  }
  func.func @transform_0(%arg0: i32) -> (i32, i32) {
    %c0_i32 = arith.constant 0 : i32
    %c0_i32_0 = arith.constant 0 : i32
    %c0_i32_1 = arith.constant 0 : i32
    return %c0_i32, %c0_i32_0 : i32, i32
  }
  func.func @transform_1(%arg0: i32) -> (i32, i32) {
    %c0_i32 = arith.constant 0 : i32
    %c0_i32_0 = arith.constant 0 : i32
    %c0_i32_1 = arith.constant 0 : i32
    return %c0_i32, %c0_i32_0 : i32, i32
  }
  func.func @transform_2(%arg0: i32) -> (i32, i32) {
    %c0_i32 = arith.constant 0 : i32
    %c0_i32_0 = arith.constant 0 : i32
    %c0_i32_1 = arith.constant 0 : i32
    return %c0_i32, %c0_i32_0 : i32, i32
  }
  func.func @transform_3(%arg0: i32) -> (i32, i32) {
    %c0_i32 = arith.constant 0 : i32
    %c0_i32_0 = arith.constant 0 : i32
    %c0_i32_1 = arith.constant 0 : i32
    return %c0_i32, %c0_i32_0 : i32, i32
  }
  func.func @transform_4(%arg0: i32) -> (i32, i32) {
    %c0_i32 = arith.constant 0 : i32
    %c0_i32_0 = arith.constant 0 : i32
    %c0_i32_1 = arith.constant 0 : i32
    return %c0_i32, %c0_i32_0 : i32, i32
  }
  func.func @transform_5(%arg0: i32) -> (i32, i32) {
    %c0_i32 = arith.constant 0 : i32
    %c0_i32_0 = arith.constant 0 : i32
    %c0_i32_1 = arith.constant 0 : i32
    return %c0_i32, %c0_i32_0 : i32, i32
  }
  func.func @transform_6(%arg0: i32) -> (i32, i32) {
    %c0_i32 = arith.constant 0 : i32
    %c0_i32_0 = arith.constant 0 : i32
    %c0_i32_1 = arith.constant 0 : i32
    return %c0_i32, %c0_i32_0 : i32, i32
  }
}

</mosaic_0001>

<llo_original>
// kernel: discriminator_forward.4
$region0: #{discriminator_forward.4}
  #allocation0 [shape = 'u32[]', space=smem, size = 0x4, offset = 0x4, fixed_abs, tag = 'smem constant byte address 0x4 - core index']
  #allocation1 [shape = 'u32[72,128]{1,0:T(1,128)}', space=vmem, size = 0x9000, scoped, tag = 'internal scratch']
  %s0 = inlined_call_operand.vmem [shape: bf16[48,2048], index: 0, kind: input, shape index: {}]
  %s1 = inlined_call_operand.vmem [shape: bf16[8,48], index: 1, kind: input, shape index: {}]
  %s2 = inlined_call_operand.vmem [shape: f32[8,1], index: 2, kind: input, shape index: {}]
  %s3 = inlined_call_operand.vmem [shape: bf16[8,2048], index: 3, kind: output, shape index: {}]
  %s4 = sld [smem:[#allocation0]]
  $region68: #{discriminator_forward.4} parent=0
    _
  %s6 = ssub.s32 1, %s4
  %s7 = scalar_select 0, %s6, %s4
  $region1: #{discriminator_forward.4} parent=0
    #allocation2 [shape = 'u8[196608]{0}', space=vmem, size = 0x30000, scoped, tag = 'input window, operand 0']
    loop: start=0, step=1, limit=4
    $region2: #{discriminator_forward.4} parent=1 // loop_pre_header
      _
    $region3: #{discriminator_forward.4} parent=1 // loop_header
      %s9 = sphi 0, %s13
      %p10 = scmp.ge.s32.totalorder %s9, 4
      %s19 = sphi 0, %s21
      %s22 = sphi 0, %s19
      %s23 = sphi 0, %s22
      %s39 = sphi 0, %s23
      %s43 = sphi 0, %s43
      %s45 = sphi 0, %s43
      %s46 = sphi 0, %s45
      %s60 = sphi 0, %s46
      %s64 = sphi 0, %s64
      %s66 = sphi 0, %s64
      %s67 = sphi 0, %s66
      %s81 = sphi 0, %s67
      %s87 = sphi 0, %s89
      %s90 = sphi 0, %s87
      %s91 = sphi 0, %s90
      %s107 = sphi 0, %s91
    $region4: #{discriminator_forward.4} parent=1 // loop_header_branch
      %12 = sbr.rel (%p10) target = $region8
    $region5: #{discriminator_forward.4} parent=1 // loop_body
      %s14 = ssub.s32 %s9, 1
      %s15 = ssub.s32 %s9, 2
      %s16 = sadd.s32 %s9, 1
      %s17 = ssub.s32 %s9, %s16
      %p18 = scmp.eq.s32.totalorder %s17, 0
      %s20 = sadd.s32 %s19, 1
      %s21 = scalar_select %p18, %s19, %s20
      %p24 = pneg %p18
      %p25 = scmp.eq.s32.totalorder %s9, 1
      %p26 = por %p24, %p25
      %p27 = scmp.ne.s32.totalorder %s19, %s22
      %p28 = scmp.eq.s32.totalorder %s9, 0
      %p29 = por %p27, %p28
      %p30 = scmp.ne.s32.totalorder %s19, %s22
      %p31 = scmp.eq.s32.totalorder %s14, 1
      %p32 = por %p30, %p31
      %p33 = scmp.ne.s32.totalorder %s22, %s23
      %p34 = scmp.eq.s32.totalorder %s14, 0
      %p35 = por %p33, %p34
      %p36 = scmp.ne.s32.totalorder %s22, %s23
      %p37 = scmp.eq.s32.totalorder %s15, 1
      %p38 = por %p36, %p37
      %p40 = scmp.ne.s32.totalorder %s23, %s39
      %p41 = scmp.eq.s32.totalorder %s15, 0
      %p42 = por %p40, %p41
      %s44 = sadd.s32 %s43, 1
      %p47 = scmp.eq.s32.totalorder %s9, 1
      %p48 = scmp.ne.s32.totalorder %s43, %s45
      %p49 = scmp.eq.s32.totalorder %s9, 0
      %p50 = por %p48, %p49
      %p51 = scmp.ne.s32.totalorder %s43, %s45
      %p52 = scmp.eq.s32.totalorder %s14, 1
      %p53 = por %p51, %p52
      %p54 = scmp.ne.s32.totalorder %s45, %s46
      %p55 = scmp.eq.s32.totalorder %s14, 0
      %p56 = por %p54, %p55
      %p57 = scmp.ne.s32.totalorder %s45, %s46
      %p58 = scmp.eq.s32.totalorder %s15, 1
      %p59 = por %p57, %p58
      %p61 = scmp.ne.s32.totalorder %s46, %s60
      %p62 = scmp.eq.s32.totalorder %s15, 0
      %p63 = por %p61, %p62
      %s65 = sadd.s32 %s64, 1
      %p68 = scmp.eq.s32.totalorder %s9, 1
      %p69 = scmp.ne.s32.totalorder %s64, %s66
      %p70 = scmp.eq.s32.totalorder %s9, 0
      %p71 = por %p69, %p70
      %p72 = scmp.ne.s32.totalorder %s64, %s66
      %p73 = scmp.eq.s32.totalorder %s14, 1
      %p74 = por %p72, %p73
      %p75 = scmp.ne.s32.totalorder %s66, %s67
      %p76 = scmp.eq.s32.totalorder %s14, 0
      %p77 = por %p75, %p76
      %p78 = scmp.ne.s32.totalorder %s66, %s67
      %p79 = scmp.eq.s32.totalorder %s15, 1
      %p80 = por %p78, %p79
      %p82 = scmp.ne.s32.totalorder %s67, %s81
      %p83 = scmp.eq.s32.totalorder %s15, 0
      %p84 = por %p82, %p83
      %s85 = ssub.s32 %s9, %s16
      %p86 = scmp.eq.s32.totalorder %s85, 0
      %s88 = sadd.s32 %s87, 1
      %s89 = scalar_select %p86, %s87, %s88
      %p92 = pneg %p86
      %p93 = scmp.eq.s32.totalorder %s9, 1
      %p94 = por %p92, %p93
      %p95 = scmp.ne.s32.totalorder %s87, %s90
      %p96 = scmp.eq.s32.totalorder %s9, 0
      %p97 = por %p95, %p96
      %p98 = scmp.ne.s32.totalorder %s87, %s90
      %p99 = scmp.eq.s32.totalorder %s14, 1
      %p100 = por %p98, %p99
      %p101 = scmp.ne.s32.totalorder %s90, %s91
      %p102 = scmp.eq.s32.totalorder %s14, 0
      %p103 = por %p101, %p102
      %p104 = scmp.ne.s32.totalorder %s90, %s91
      %p105 = scmp.eq.s32.totalorder %s15, 1
      %p106 = por %p104, %p105
      %p108 = scmp.ne.s32.totalorder %s91, %s107
      %p109 = scmp.eq.s32.totalorder %s15, 0
      %p110 = por %p108, %p109
      %p111 = scmp.le.s32.totalorder 1, %s9
      %p112 = scmp.lt.s32.totalorder %s9, 3
      %p113 = pnand %p111, %p112
      %p114 = pneg %p113
      // Predicated region
      $region9: #{discriminator_forward.4} parent=5 // pred_check
        _
      $region10: #{discriminator_forward.4} parent=5 // pred_check_branch
        %116 = sbr.rel (%p113) target = $region12
      $region11: #{discriminator_forward.4} parent=5 // pred_region
        %s117 = ssub.s32 %s9, 1
        // Predicated region
        $region13: #{discriminator_forward.4} parent=11 // pred_check
          %p118 = pneg %p56
        $region14: #{discriminator_forward.4} parent=11 // pred_check_branch
          %120 = sbr.rel (%p118) target = $region16
        $region15: #{discriminator_forward.4} parent=11 // pred_region
          _
        $region16: #{discriminator_forward.4} parent=11 // pred_fallthru
          _
        // Predicated region
        $region17: #{discriminator_forward.4} parent=11 // pred_check
          %p121 = pneg %p77
        $region18: #{discriminator_forward.4} parent=11 // pred_check_branch
          %123 = sbr.rel (%p121) target = $region20
        $region19: #{discriminator_forward.4} parent=11 // pred_region
          _
        $region20: #{discriminator_forward.4} parent=11 // pred_fallthru
          _
      $region12: #{discriminator_forward.4} parent=5 // pred_fallthru
        _
      %p124 = scmp.lt.s32.totalorder %s9, 2
      // Predicated region
      $region21: #{discriminator_forward.4} parent=5 // pred_check
        %p125 = pneg %p124
      $region22: #{discriminator_forward.4} parent=5 // pred_check_branch
        %127 = sbr.rel (%p125) target = $region24
      $region23: #{discriminator_forward.4} parent=5 // pred_region
        // Predicated region
        $region25: #{discriminator_forward.4} parent=23 // pred_check
          %p128 = pneg %p29
        $region26: #{discriminator_forward.4} parent=23 // pred_check_branch
          %130 = sbr.rel (%p128) target = $region28
        $region27: #{discriminator_forward.4} parent=23 // pred_region
          %s131 = sand.u32 %s19, 1
          %s132 = sand.u32 %s19, 1
          %s133 = smul.addr %s132, 192
          %s134 = scalar_lea.vmem [#allocation2], %s133
          %s135 = smul.u32 8, %s9
          %s136 = smul.addr %s135, 4
          %s137 = scalar_lea.vmem %s0, %s136
          // Predicated region
          $region29: #{discriminator_forward.4} parent=27 // pred_check
            _
          $region30: #{discriminator_forward.4} parent=27 // pred_check_branch
            %139 = sbr.rel (0) target = $region32
          $region31: #{discriminator_forward.4} parent=27 // pred_region
            // Predicated region
            $region33: #{discriminator_forward.4} parent=31 // pred_check
              _
            $region34: #{discriminator_forward.4} parent=31 // pred_check_branch
              %141 = sbr.rel (0) target = $region36
            $region35: #{discriminator_forward.4} parent=31 // pred_region
              loop: start=0, step=1, limit=1
              $region37: #{discriminator_forward.4} parent=35 // loop_pre_header
                _
              $region38: #{discriminator_forward.4} parent=35 // loop_header
                %s143 = sphi 0, %s147
                %p144 = scmp.ge.s32.totalorder %s143, 1
                %s148 = sphi %s137, %s137
                %s149 = sphi %s134, %s134
              $region39: #{discriminator_forward.4} parent=35 // loop_header_branch
                %146 = sbr.rel (%p144) target = $region43
              $region40: #{discriminator_forward.4} parent=35 // loop_body
                %v150 = vld [vmem:[%s148] sm:$0xff]
                %151 = vst [vmem:[%s149] sm:$0xff] %v150
                %v152 = vld [vmem:[%s148 + $0x8] sm:$0xff]
                %153 = vst [vmem:[%s149 + $0x8] sm:$0xff] %v152
                %v154 = vld [vmem:[%s148 + $0x10] sm:$0xff]
                %155 = vst [vmem:[%s149 + $0x10] sm:$0xff] %v154
                %v156 = vld [vmem:[%s148 + $0x18] sm:$0xff]
                %157 = vst [vmem:[%s149 + $0x18] sm:$0xff] %v156
                %v158 = vld [vmem:[%s148 + $0x40] sm:$0xff]
                %159 = vst [vmem:[%s149 + $0x20] sm:$0xff] %v158
                %v160 = vld [vmem:[%s148 + $0x48] sm:$0xff]
                %161 = vst [vmem:[%s149 + $0x28] sm:$0xff] %v160
                %v162 = vld [vmem:[%s148 + $0x50] sm:$0xff]
                %163 = vst [vmem:[%s149 + $0x30] sm:$0xff] %v162
                %v164 = vld [vmem:[%s148 + $0x58] sm:$0xff]
                %165 = vst [vmem:[%s149 + $0x38] sm:$0xff] %v164
                %v166 = vld [vmem:[%s148 + $0x80] sm:$0xff]
                %167 = vst [vmem:[%s149 + $0x40] sm:$0xff] %v166
                %v168 = vld [vmem:[%s148 + $0x88] sm:$0xff]
                %169 = vst [vmem:[%s149 + $0x48] sm:$0xff] %v168
                %v170 = vld [vmem:[%s148 + $0x90] sm:$0xff]
                %171 = vst [vmem:[%s149 + $0x50] sm:$0xff] %v170
                %v172 = vld [vmem:[%s148 + $0x98] sm:$0xff]
                %173 = vst [vmem:[%s149 + $0x58] sm:$0xff] %v172
                %v174 = vld [vmem:[%s148 + $0xc0] sm:$0xff]
                %175 = vst [vmem:[%s149 + $0x60] sm:$0xff] %v174
                %v176 = vld [vmem:[%s148 + $0xc8] sm:$0xff]
                %177 = vst [vmem:[%s149 + $0x68] sm:$0xff] %v176
                %v178 = vld [vmem:[%s148 + $0xd0] sm:$0xff]
                %179 = vst [vmem:[%s149 + $0x70] sm:$0xff] %v178
                %v180 = vld [vmem:[%s148 + $0xd8] sm:$0xff]
                %181 = vst [vmem:[%s149 + $0x78] sm:$0xff] %v180
                %v182 = vld [vmem:[%s148 + $0x100] sm:$0xff]
                %183 = vst [vmem:[%s149 + $0x80] sm:$0xff] %v182
                %v184 = vld [vmem:[%s148 + $0x108] sm:$0xff]
                %185 = vst [vmem:[%s149 + $0x88] sm:$0xff] %v184
                %v186 = vld [vmem:[%s148 + $0x110] sm:$0xff]
                %187 = vst [vmem:[%s149 + $0x90] sm:$0xff] %v186
                %v188 = vld [vmem:[%s148 + $0x118] sm:$0xff]
                %189 = vst [vmem:[%s149 + $0x98] sm:$0xff] %v188
                %v190 = vld [vmem:[%s148 + $0x140] sm:$0xff]
                %191 = vst [vmem:[%s149 + $0xa0] sm:$0xff] %v190
                %v192 = vld [vmem:[%s148 + $0x148] sm:$0xff]
                %193 = vst [vmem:[%s149 + $0xa8] sm:$0xff] %v192
                %v194 = vld [vmem:[%s148 + $0x150] sm:$0xff]
                %195 = vst [vmem:[%s149 + $0xb0] sm:$0xff] %v194
                %v196 = vld [vmem:[%s148 + $0x158] sm:$0xff]
                %197 = vst [vmem:[%s149 + $0xb8] sm:$0xff] %v196
              $region41: #{discriminator_forward.4} parent=35 // loop_footer
                %s147 = sadd.s32 1, %s143
              $region42: #{discriminator_forward.4} parent=35 // loop_footer_branch
                %142 = sbr.rel target = $region38
              $region43: #{discriminator_forward.4} parent=35 // loop_exit
                _
            $region36: #{discriminator_forward.4} parent=31 // pred_fallthru
              _
            // Predicated region
            $region44: #{discriminator_forward.4} parent=31 // pred_check
              _
            $region45: #{discriminator_forward.4} parent=31 // pred_check_branch
              %199 = sbr.rel target = $region47
            $region46: #{discriminator_forward.4} parent=31 // pred_region
              _
            $region47: #{discriminator_forward.4} parent=31 // pred_fallthru
              _
          $region32: #{discriminator_forward.4} parent=27 // pred_fallthru
            _
          %200 = vnop
        $region28: #{discriminator_forward.4} parent=23 // pred_fallthru
          _
      $region24: #{discriminator_forward.4} parent=5 // pred_fallthru
        _
      %p201 = scmp.le.s32.totalorder 1, %s9
      %p202 = scmp.lt.s32.totalorder %s9, 3
      %p203 = pnand %p201, %p202
      %p204 = pneg %p203
      // Predicated region
      $region48: #{discriminator_forward.4} parent=5 // pred_check
        _
      $region49: #{discriminator_forward.4} parent=5 // pred_check_branch
        %206 = sbr.rel (%p203) target = $region51
      $region50: #{discriminator_forward.4} parent=5 // pred_region
        %s207 = ssub.s32 %s9, 1
        %s208 = sand.u32 %s22, 1
        %s209 = sand.u32 %s22, 1
        %s210 = smul.addr %s209, 192
        %s211 = scalar_lea.vmem [#allocation2], %s210
        // Predicated region
        $region52: #{discriminator_forward.4} parent=50 // pred_check
          %p212 = pneg %p35
        $region53: #{discriminator_forward.4} parent=50 // pred_check_branch
          %214 = sbr.rel (%p212) target = $region55
        $region54: #{discriminator_forward.4} parent=50 // pred_region
          _
        $region55: #{discriminator_forward.4} parent=50 // pred_fallthru
          _
        %s215 = sand.u32 %s22, 1
        %s216 = sand.u32 %s22, 1
        %s217 = smul.addr %s216, 192
        %s218 = scalar_lea.vmem [#allocation2], %s217
        %p219 = pneg %p35
        %p220 = pneg %p32
        %p221 = pneg %p56
        %p222 = pneg %p53
        %p223 = pneg %p77
        %p224 = pneg %p74
        %p225 = pneg %p103
        %p226 = pneg %p100
        %s227 = smul.u32 8, %s14
        %p228 = scmp.lt.s32.totalorder %s227, 15
        %s229 = scalar_select %p228, %s227, 15
        %s230 = smul.addr %s229, 4
        %s231 = scalar_lea.vmem %s3, %s230
        %s232 = smul.u32 8, %s14
        %s233 = smul.u32 8, %s14
        %p234 = scmp.lt.s32.totalorder %s233, 15
        %s235 = scalar_select %p234, %s233, 15
        %s236 = smul.addr %s235, 4
        %s237 = scalar_lea.vmem %s3, %s236
        %s238 = smul.u32 8, %s14
        %v240 = vld [vmem:[%s1] sm:$0xf]
        %v241 = vld [vmem:[%s211] sm:$0xff]
        %v242 = vld [vmem:[%s211 + $0x8] sm:$0xff]
        %v243 = vld [vmem:[%s211 + $0x10] sm:$0xff]
        %v244 = vld [vmem:[%s211 + $0x18] sm:$0xff]
        %v245 = vld [vmem:[%s211 + $0x20] sm:$0xff]
        %v246 = vld [vmem:[%s211 + $0x28] sm:$0xff]
        %v247 = vld [vmem:[%s211 + $0x30] sm:$0xff]
        %v248 = vld [vmem:[%s211 + $0x38] sm:$0xff]
        %v249 = vld [vmem:[%s211 + $0x40] sm:$0xff]
        %v250 = vld [vmem:[%s211 + $0x48] sm:$0xff]
        %v251 = vld [vmem:[%s211 + $0x50] sm:$0xff]
        %v252 = vld [vmem:[%s211 + $0x58] sm:$0xff]
        %v253 = vld [vmem:[%s211 + $0x60] sm:$0xff]
        %v254 = vld [vmem:[%s211 + $0x68] sm:$0xff]
        %v255 = vld [vmem:[%s211 + $0x70] sm:$0xff]
        %v256 = vld [vmem:[%s211 + $0x78] sm:$0xff]
        %v257 = vld [vmem:[%s211 + $0x80] sm:$0xff]
        %v258 = vld [vmem:[%s211 + $0x88] sm:$0xff]
        %v259 = vld [vmem:[%s211 + $0x90] sm:$0xff]
        %v260 = vld [vmem:[%s211 + $0x98] sm:$0xff]
        %v261 = vld [vmem:[%s211 + $0xa0] sm:$0xff]
        %v262 = vld [vmem:[%s211 + $0xa8] sm:$0xff]
        %v263 = vld [vmem:[%s211 + $0xb0] sm:$0xff]
        %v264 = vld [vmem:[%s211 + $0xb8] sm:$0xff]
        %v265 = vld [vmem:[%s2] sm:$0xff]
        %267 = vset.pattern.permute.xlu0 0
        %268 = vperm.xlu0 %267, %v265
        %v269 = vpop.permute.xlu0 %268
        %v295 = vunpack.c.l.b16 %v241
        %v296 = vunpack.c.h.b16 %v241
        %v297 = vunpack.c.l.b16 %v242
        %v298 = vunpack.c.h.b16 %v242
        %v299 = vunpack.c.l.b16 %v243
        %v300 = vunpack.c.h.b16 %v243
        %v301 = vunpack.c.l.b16 %v244
        %v302 = vunpack.c.h.b16 %v244
        %v303 = vunpack.c.l.b16 %v245
        %v304 = vunpack.c.h.b16 %v245
        %v305 = vunpack.c.l.b16 %v246
        %v306 = vunpack.c.h.b16 %v246
        %v307 = vunpack.c.l.b16 %v247
        %v308 = vunpack.c.h.b16 %v247
        %v309 = vunpack.c.l.b16 %v248
        %v310 = vunpack.c.h.b16 %v248
        %v311 = vunpack.c.l.b16 %v249
        %v312 = vunpack.c.h.b16 %v249
        %v313 = vunpack.c.l.b16 %v250
        %v314 = vunpack.c.h.b16 %v250
        %v315 = vunpack.c.l.b16 %v251
        %v316 = vunpack.c.h.b16 %v251
        %v317 = vunpack.c.l.b16 %v252
        %v318 = vunpack.c.h.b16 %v252
        %v319 = vunpack.c.l.b16 %v253
        %v320 = vunpack.c.h.b16 %v253
        %v321 = vunpack.c.l.b16 %v254
        %v322 = vunpack.c.h.b16 %v254
        %v323 = vunpack.c.l.b16 %v255
        %v324 = vunpack.c.h.b16 %v255
        %v325 = vunpack.c.l.b16 %v256
        %v326 = vunpack.c.h.b16 %v256
        %v327 = vunpack.c.l.b16 %v257
        %v328 = vunpack.c.h.b16 %v257
        %v329 = vunpack.c.l.b16 %v258
        %v330 = vunpack.c.h.b16 %v258
        %v331 = vunpack.c.l.b16 %v259
        %v332 = vunpack.c.h.b16 %v259
        %v333 = vunpack.c.l.b16 %v260
        %v334 = vunpack.c.h.b16 %v260
        %v335 = vunpack.c.l.b16 %v261
        %v336 = vunpack.c.h.b16 %v261
        %v337 = vunpack.c.l.b16 %v262
        %v338 = vunpack.c.h.b16 %v262
        %v339 = vunpack.c.l.b16 %v263
        %v340 = vunpack.c.h.b16 %v263
        %v341 = vunpack.c.l.b16 %v264
        %v342 = vunpack.c.h.b16 %v264
        %v343 = vpack.c.b16 %v303, %v295
        %v344 = vpack.c.b16 %v304, %v296
        %v345 = vpack.c.b16 %v305, %v297
        %v346 = vpack.c.b16 %v306, %v298
        %v347 = vpack.c.b16 %v307, %v299
        %v348 = vpack.c.b16 %v308, %v300
        %v349 = vpack.c.b16 %v309, %v301
        %v350 = vpack.c.b16 %v310, %v302
        %v351 = vpack.c.b16 %v319, %v311
        %v352 = vpack.c.b16 %v320, %v312
        %v353 = vpack.c.b16 %v321, %v313
        %v354 = vpack.c.b16 %v322, %v314
        %v355 = vpack.c.b16 %v323, %v315
        %v356 = vpack.c.b16 %v324, %v316
        %v357 = vpack.c.b16 %v325, %v317
        %v358 = vpack.c.b16 %v326, %v318
        %v359 = vpack.c.b16 %v335, %v327
        %v360 = vpack.c.b16 %v336, %v328
        %v361 = vpack.c.b16 %v337, %v329
        %v362 = vpack.c.b16 %v338, %v330
        %v363 = vpack.c.b16 %v339, %v331
        %v364 = vpack.c.b16 %v340, %v332
        %v365 = vpack.c.b16 %v341, %v333
        %v366 = vpack.c.b16 %v342, %v334
        %vm391 = vcmask 392192
        %v393 = vsel %vm391, %v240, 0
        %395 = vmatpush.bf16.msra.mxu0 0
        %396 = vmatpush.bf16.msra.mxu0 0
        %397 = vmatpush.bf16.msra.mxu0 0
        %398 = vmatpush.bf16.msra.mxu0 0
        %399 = vmatpush.bf16.msra.mxu0 0
        %400 = vmatpush.bf16.msra.mxu0 %v359
        %401 = vmatpush.bf16.msra.mxu0 %v351
        %402 = vmatpush.bf16.msra.mxu0 %v343
        %403 = vmatmul.bf16.gmra.mxu0 %v393
        %v404 = vpop.f32.mrf.mxu0
        %v405 = vadd.f32 %v269, %v404
        %v406 = vpop.f32.mrf.mxu0
        %407 = vdwg.mxu0
        %408 = vmatpush.bf16.msra.mxu0 0
        %409 = vmatpush.bf16.msra.mxu0 0
        %410 = vmatpush.bf16.msra.mxu0 0
        %411 = vmatpush.bf16.msra.mxu0 0
        %412 = vmatpush.bf16.msra.mxu0 0
        %413 = vmatpush.bf16.msra.mxu0 %v360
        %414 = vmatpush.bf16.msra.mxu0 %v352
        %415 = vmatpush.bf16.msra.mxu0 %v344
        %416 = vmatmul.bf16.gmra.mxu0 %v393
        %v417 = vpop.f32.mrf.mxu0
        %v418 = vadd.f32 %v269, %v417
        %v419 = vpop.f32.mrf.mxu0
        %420 = vdwg.mxu0
        %421 = vmatpush.bf16.msra.mxu0 0
        %422 = vmatpush.bf16.msra.mxu0 0
        %423 = vmatpush.bf16.msra.mxu0 0
        %424 = vmatpush.bf16.msra.mxu0 0
        %425 = vmatpush.bf16.msra.mxu0 0
        %426 = vmatpush.bf16.msra.mxu0 %v361
        %427 = vmatpush.bf16.msra.mxu0 %v353
        %428 = vmatpush.bf16.msra.mxu0 %v345
        %429 = vmatmul.bf16.gmra.mxu0 %v393
        %v430 = vpop.f32.mrf.mxu0
        %v431 = vadd.f32 %v269, %v430
        %v432 = vpop.f32.mrf.mxu0
        %433 = vdwg.mxu0
        %434 = vmatpush.bf16.msra.mxu0 0
        %435 = vmatpush.bf16.msra.mxu0 0
        %436 = vmatpush.bf16.msra.mxu0 0
        %437 = vmatpush.bf16.msra.mxu0 0
        %438 = vmatpush.bf16.msra.mxu0 0
        %439 = vmatpush.bf16.msra.mxu0 %v362
        %440 = vmatpush.bf16.msra.mxu0 %v354
        %441 = vmatpush.bf16.msra.mxu0 %v346
        %442 = vmatmul.bf16.gmra.mxu0 %v393
        %v443 = vpop.f32.mrf.mxu0
        %v444 = vadd.f32 %v269, %v443
        %v445 = vpop.f32.mrf.mxu0
        %446 = vdwg.mxu0
        %447 = vmatpush.bf16.msra.mxu0 0
        %448 = vmatpush.bf16.msra.mxu0 0
        %449 = vmatpush.bf16.msra.mxu0 0
        %450 = vmatpush.bf16.msra.mxu0 0
        %451 = vmatpush.bf16.msra.mxu0 0
        %452 = vmatpush.bf16.msra.mxu0 %v363
        %453 = vmatpush.bf16.msra.mxu0 %v355
        %454 = vmatpush.bf16.msra.mxu0 %v347
        %455 = vmatmul.bf16.gmra.mxu0 %v393
        %v456 = vpop.f32.mrf.mxu0
        %v457 = vadd.f32 %v269, %v456
        %v458 = vpop.f32.mrf.mxu0
        %459 = vdwg.mxu0
        %460 = vmatpush.bf16.msra.mxu0 0
        %461 = vmatpush.bf16.msra.mxu0 0
        %462 = vmatpush.bf16.msra.mxu0 0
        %463 = vmatpush.bf16.msra.mxu0 0
        %464 = vmatpush.bf16.msra.mxu0 0
        %465 = vmatpush.bf16.msra.mxu0 %v364
        %466 = vmatpush.bf16.msra.mxu0 %v356
        %467 = vmatpush.bf16.msra.mxu0 %v348
        %468 = vmatmul.bf16.gmra.mxu0 %v393
        %v469 = vpop.f32.mrf.mxu0
        %v470 = vadd.f32 %v269, %v469
        %v471 = vpop.f32.mrf.mxu0
        %472 = vdwg.mxu0
        %473 = vmatpush.bf16.msra.mxu0 0
        %474 = vmatpush.bf16.msra.mxu0 0
        %475 = vmatpush.bf16.msra.mxu0 0
        %476 = vmatpush.bf16.msra.mxu0 0
        %477 = vmatpush.bf16.msra.mxu0 0
        %478 = vmatpush.bf16.msra.mxu0 %v365
        %479 = vmatpush.bf16.msra.mxu0 %v357
        %480 = vmatpush.bf16.msra.mxu0 %v349
        %481 = vmatmul.bf16.gmra.mxu0 %v393
        %v482 = vpop.f32.mrf.mxu0
        %v483 = vadd.f32 %v269, %v482
        %v484 = vpop.f32.mrf.mxu0
        %485 = vdwg.mxu0
        %486 = vmatpush.bf16.msra.mxu0 0
        %487 = vmatpush.bf16.msra.mxu0 0
        %488 = vmatpush.bf16.msra.mxu0 0
        %489 = vmatpush.bf16.msra.mxu0 0
        %490 = vmatpush.bf16.msra.mxu0 0
        %491 = vmatpush.bf16.msra.mxu0 %v366
        %492 = vmatpush.bf16.msra.mxu0 %v358
        %493 = vmatpush.bf16.msra.mxu0 %v350
        %494 = vmatmul.bf16.gmra.mxu0 %v393
        %v495 = vpop.f32.mrf.mxu0
        %v496 = vadd.f32 %v269, %v495
        %v497 = vpop.f32.mrf.mxu0
        %498 = vdwg.mxu0
        %vm499 = vcmp.ge.f32.partialorder %v405, 0.0
        %vm500 = vcmp.ge.f32.partialorder %v418, 0.0
        %vm501 = vcmp.ge.f32.partialorder %v431, 0.0
        %vm502 = vcmp.ge.f32.partialorder %v444, 0.0
        %vm503 = vcmp.ge.f32.partialorder %v457, 0.0
        %vm504 = vcmp.ge.f32.partialorder %v470, 0.0
        %vm505 = vcmp.ge.f32.partialorder %v483, 0.0
        %vm506 = vcmp.ge.f32.partialorder %v496, 0.0
        %v507 = vmul.f32 %v405, 0.2
        %v508 = vmul.f32 %v418, 0.2
        %v509 = vmul.f32 %v431, 0.2
        %v510 = vmul.f32 %v444, 0.2
        %v511 = vmul.f32 %v457, 0.2
        %v512 = vmul.f32 %v470, 0.2
        %v513 = vmul.f32 %v483, 0.2
        %v514 = vmul.f32 %v496, 0.2
        %v515 = vsel %vm499, %v405, %v507
        %v516 = vsel %vm500, %v418, %v508
        %v517 = vsel %vm501, %v431, %v509
        %v518 = vsel %vm502, %v444, %v510
        %v519 = vsel %vm503, %v457, %v511
        %v520 = vsel %vm504, %v470, %v512
        %v521 = vsel %vm505, %v483, %v513
        %v522 = vsel %vm506, %v496, %v514
        %v523 = vpack.c.bf16 %v516, %v515
        %v524 = vpack.c.bf16 %v518, %v517
        %v525 = vpack.c.bf16 %v520, %v519
        %v526 = vpack.c.bf16 %v522, %v521
        %527 = vst [vmem:[%s237] sm:$0xff] %v523
        %528 = vst [vmem:[%s237 + $0x8] sm:$0xff] %v524
        %529 = vst [vmem:[%s237 + $0x10] sm:$0xff] %v525
        %530 = vst [vmem:[%s237 + $0x18] sm:$0xff] %v526
        %s531 = smul.u32 8, %s14
        %p532 = scmp.lt.s32.totalorder %s531, 15
        %s533 = scalar_select %p532, %s531, 15
        %s534 = smul.addr %s533, 4
        %s535 = scalar_lea.vmem %s3, %s534
        // Predicated region
        $region56: #{discriminator_forward.4} parent=50 // pred_check
          %p536 = pneg %p100
        $region57: #{discriminator_forward.4} parent=50 // pred_check_branch
          %538 = sbr.rel (%p536) target = $region59
        $region58: #{discriminator_forward.4} parent=50 // pred_region
          %s539 = smul.u32 8, %s14
        $region59: #{discriminator_forward.4} parent=50 // pred_fallthru
          _
      $region51: #{discriminator_forward.4} parent=5 // pred_fallthru
        _
      %p540 = scmp.le.s32.totalorder 2, %s9
      // Predicated region
      $region60: #{discriminator_forward.4} parent=5 // pred_check
        %p541 = pneg %p540
      $region61: #{discriminator_forward.4} parent=5 // pred_check_branch
        %543 = sbr.rel (%p541) target = $region63
      $region62: #{discriminator_forward.4} parent=5 // pred_region
        %s544 = ssub.s32 %s9, 2
        // Predicated region
        $region64: #{discriminator_forward.4} parent=62 // pred_check
          %p545 = pneg %p106
        $region65: #{discriminator_forward.4} parent=62 // pred_check_branch
          %547 = sbr.rel (%p545) target = $region67
        $region66: #{discriminator_forward.4} parent=62 // pred_region
          %s548 = smul.u32 8, %s15
          %p549 = scmp.lt.s32.totalorder %s548, 15
          %s550 = scalar_select %p549, %s548, 15
          %s551 = smul.addr %s550, 4
          %s552 = scalar_lea.vmem %s3, %s551
        $region67: #{discriminator_forward.4} parent=62 // pred_fallthru
          _
      $region63: #{discriminator_forward.4} parent=5 // pred_fallthru
        _
    $region6: #{discriminator_forward.4} parent=1 // loop_footer
      %s13 = sadd.s32 1, %s9
    $region7: #{discriminator_forward.4} parent=1 // loop_footer_branch
      %8 = sbr.rel target = $region3
    $region8: #{discriminator_forward.4} parent=1 // loop_exit
      _

// kernel: discriminator_forward.5
$region0: #{discriminator_forward.5}
  #allocation0 [shape = 'u32[]', space=smem, size = 0x4, offset = 0x4, fixed_abs, tag = 'smem constant byte address 0x4 - core index']
  #allocation1 [shape = 'u32[72,128]{1,0:T(1,128)}', space=vmem, size = 0x9000, scoped, tag = 'internal scratch']
  %s0 = inlined_call_operand.vmem [shape: bf16[128,512], index: 0, kind: input, shape index: {}]
  %s1 = inlined_call_operand.vmem [shape: bf16[16,128], index: 1, kind: input, shape index: {}]
  %s2 = inlined_call_operand.vmem [shape: f32[16,1], index: 2, kind: input, shape index: {}]
  %s3 = inlined_call_operand.vmem [shape: bf16[16,512], index: 3, kind: output, shape index: {}]
  %s4 = sld [smem:[#allocation0]]
  $region117: #{discriminator_forward.5} parent=0
    _
  %s6 = ssub.s32 1, %s4
  %s7 = scalar_select 0, %s6, %s4
  $region1: #{discriminator_forward.5} parent=0
    #allocation2 [shape = 'u8[131072]{0}', space=vmem, size = 0x20000, scoped, tag = 'input window, operand 0']
    #allocation3 [shape = 'u8[16384]{0}', space=vmem, size = 0x4000, scoped, tag = 'output window, operand 0']
    loop: start=0, step=1, limit=4
    $region2: #{discriminator_forward.5} parent=1 // loop_pre_header
      _
    $region3: #{discriminator_forward.5} parent=1 // loop_header
      %s9 = sphi 0, %s13
      %p10 = scmp.ge.s32.totalorder %s9, 4
      %s19 = sphi 0, %s21
      %s22 = sphi 0, %s19
      %s23 = sphi 0, %s22
      %s39 = sphi 0, %s23
      %s43 = sphi 0, %s43
      %s45 = sphi 0, %s43
      %s46 = sphi 0, %s45
      %s60 = sphi 0, %s46
      %s64 = sphi 0, %s64
      %s66 = sphi 0, %s64
      %s67 = sphi 0, %s66
      %s81 = sphi 0, %s67
      %s87 = sphi 0, %s89
      %s90 = sphi 0, %s87
      %s91 = sphi 0, %s90
      %s107 = sphi 0, %s91
    $region4: #{discriminator_forward.5} parent=1 // loop_header_branch
      %12 = sbr.rel (%p10) target = $region8
    $region5: #{discriminator_forward.5} parent=1 // loop_body
      %s14 = ssub.s32 %s9, 1
      %s15 = ssub.s32 %s9, 2
      %s16 = sadd.s32 %s9, 1
      %s17 = ssub.s32 %s9, %s16
      %p18 = scmp.eq.s32.totalorder %s17, 0
      %s20 = sadd.s32 %s19, 1
      %s21 = scalar_select %p18, %s19, %s20
      %p24 = pneg %p18
      %p25 = scmp.eq.s32.totalorder %s9, 1
      %p26 = por %p24, %p25
      %p27 = scmp.ne.s32.totalorder %s19, %s22
      %p28 = scmp.eq.s32.totalorder %s9, 0
      %p29 = por %p27, %p28
      %p30 = scmp.ne.s32.totalorder %s19, %s22
      %p31 = scmp.eq.s32.totalorder %s14, 1
      %p32 = por %p30, %p31
      %p33 = scmp.ne.s32.totalorder %s22, %s23
      %p34 = scmp.eq.s32.totalorder %s14, 0
      %p35 = por %p33, %p34
      %p36 = scmp.ne.s32.totalorder %s22, %s23
      %p37 = scmp.eq.s32.totalorder %s15, 1
      %p38 = por %p36, %p37
      %p40 = scmp.ne.s32.totalorder %s23, %s39
      %p41 = scmp.eq.s32.totalorder %s15, 0
      %p42 = por %p40, %p41
      %s44 = sadd.s32 %s43, 1
      %p47 = scmp.eq.s32.totalorder %s9, 1
      %p48 = scmp.ne.s32.totalorder %s43, %s45
      %p49 = scmp.eq.s32.totalorder %s9, 0
      %p50 = por %p48, %p49
      %p51 = scmp.ne.s32.totalorder %s43, %s45
      %p52 = scmp.eq.s32.totalorder %s14, 1
      %p53 = por %p51, %p52
      %p54 = scmp.ne.s32.totalorder %s45, %s46
      %p55 = scmp.eq.s32.totalorder %s14, 0
      %p56 = por %p54, %p55
      %p57 = scmp.ne.s32.totalorder %s45, %s46
      %p58 = scmp.eq.s32.totalorder %s15, 1
      %p59 = por %p57, %p58
      %p61 = scmp.ne.s32.totalorder %s46, %s60
      %p62 = scmp.eq.s32.totalorder %s15, 0
      %p63 = por %p61, %p62
      %s65 = sadd.s32 %s64, 1
      %p68 = scmp.eq.s32.totalorder %s9, 1
      %p69 = scmp.ne.s32.totalorder %s64, %s66
      %p70 = scmp.eq.s32.totalorder %s9, 0
      %p71 = por %p69, %p70
      %p72 = scmp.ne.s32.totalorder %s64, %s66
      %p73 = scmp.eq.s32.totalorder %s14, 1
      %p74 = por %p72, %p73
      %p75 = scmp.ne.s32.totalorder %s66, %s67
      %p76 = scmp.eq.s32.totalorder %s14, 0
      %p77 = por %p75, %p76
      %p78 = scmp.ne.s32.totalorder %s66, %s67
      %p79 = scmp.eq.s32.totalorder %s15, 1
      %p80 = por %p78, %p79
      %p82 = scmp.ne.s32.totalorder %s67, %s81
      %p83 = scmp.eq.s32.totalorder %s15, 0
      %p84 = por %p82, %p83
      %s85 = ssub.s32 %s9, %s16
      %p86 = scmp.eq.s32.totalorder %s85, 0
      %s88 = sadd.s32 %s87, 1
      %s89 = scalar_select %p86, %s87, %s88
      %p92 = pneg %p86
      %p93 = scmp.eq.s32.totalorder %s9, 1
      %p94 = por %p92, %p93
      %p95 = scmp.ne.s32.totalorder %s87, %s90
      %p96 = scmp.eq.s32.totalorder %s9, 0
      %p97 = por %p95, %p96
      %p98 = scmp.ne.s32.totalorder %s87, %s90
      %p99 = scmp.eq.s32.totalorder %s14, 1
      %p100 = por %p98, %p99
      %p101 = scmp.ne.s32.totalorder %s90, %s91
      %p102 = scmp.eq.s32.totalorder %s14, 0
      %p103 = por %p101, %p102
      %p104 = scmp.ne.s32.totalorder %s90, %s91
      %p105 = scmp.eq.s32.totalorder %s15, 1
      %p106 = por %p104, %p105
      %p108 = scmp.ne.s32.totalorder %s91, %s107
      %p109 = scmp.eq.s32.totalorder %s15, 0
      %p110 = por %p108, %p109
      %p111 = scmp.le.s32.totalorder 1, %s9
      %p112 = scmp.lt.s32.totalorder %s9, 3
      %p113 = pnand %p111, %p112
      %p114 = pneg %p113
      // Predicated region
      $region9: #{discriminator_forward.5} parent=5 // pred_check
        _
      $region10: #{discriminator_forward.5} parent=5 // pred_check_branch
        %116 = sbr.rel (%p113) target = $region12
      $region11: #{discriminator_forward.5} parent=5 // pred_region
        %s117 = ssub.s32 %s9, 1
        // Predicated region
        $region13: #{discriminator_forward.5} parent=11 // pred_check
          %p118 = pneg %p56
        $region14: #{discriminator_forward.5} parent=11 // pred_check_branch
          %120 = sbr.rel (%p118) target = $region16
        $region15: #{discriminator_forward.5} parent=11 // pred_region
          _
        $region16: #{discriminator_forward.5} parent=11 // pred_fallthru
          _
        // Predicated region
        $region17: #{discriminator_forward.5} parent=11 // pred_check
          %p121 = pneg %p77
        $region18: #{discriminator_forward.5} parent=11 // pred_check_branch
          %123 = sbr.rel (%p121) target = $region20
        $region19: #{discriminator_forward.5} parent=11 // pred_region
          _
        $region20: #{discriminator_forward.5} parent=11 // pred_fallthru
          _
      $region12: #{discriminator_forward.5} parent=5 // pred_fallthru
        _
      %p124 = scmp.lt.s32.totalorder %s9, 2
      // Predicated region
      $region21: #{discriminator_forward.5} parent=5 // pred_check
        %p125 = pneg %p124
      $region22: #{discriminator_forward.5} parent=5 // pred_check_branch
        %127 = sbr.rel (%p125) target = $region24
      $region23: #{discriminator_forward.5} parent=5 // pred_region
        // Predicated region
        $region25: #{discriminator_forward.5} parent=23 // pred_check
          %p128 = pneg %p29
        $region26: #{discriminator_forward.5} parent=23 // pred_check_branch
          %130 = sbr.rel (%p128) target = $region28
        $region27: #{discriminator_forward.5} parent=23 // pred_region
          %s131 = sand.u32 %s19, 1
          %s132 = sand.u32 %s19, 1
          %s133 = smul.addr %s132, 128
          %s134 = scalar_lea.vmem [#allocation2], %s133
          %s135 = smul.u32 2, %s9
          %s136 = smul.addr %s135, 4
          %s137 = scalar_lea.vmem %s0, %s136
          // Predicated region
          $region29: #{discriminator_forward.5} parent=27 // pred_check
            _
          $region30: #{discriminator_forward.5} parent=27 // pred_check_branch
            %139 = sbr.rel (0) target = $region32
          $region31: #{discriminator_forward.5} parent=27 // pred_region
            // Predicated region
            $region33: #{discriminator_forward.5} parent=31 // pred_check
              _
            $region34: #{discriminator_forward.5} parent=31 // pred_check_branch
              %141 = sbr.rel (0) target = $region36
            $region35: #{discriminator_forward.5} parent=31 // pred_region
              // Predicated region
              $region48: #{discriminator_forward.5} parent=35 // pred_check
                _
              $region49: #{discriminator_forward.5} parent=35 // pred_check_branch
                %187 = sbr.rel (0) target = $region51
              $region50: #{discriminator_forward.5} parent=35 // pred_region
                loop: start=0, step=1, limit=1
                $region52: #{discriminator_forward.5} parent=50 // loop_pre_header
                  _
                $region53: #{discriminator_forward.5} parent=50 // loop_header
                  %s189 = sphi 0, %s193
                  %p190 = scmp.ge.s32.totalorder %s189, 1
                  %s194 = sphi %s137, %s137
                  %s195 = sphi %s134, %s134
                $region54: #{discriminator_forward.5} parent=50 // loop_header_branch
                  %192 = sbr.rel (%p190) target = $region58
                $region55: #{discriminator_forward.5} parent=50 // loop_body
                  %v196 = vld [vmem:[%s194] sm:$0xff]
                  %197 = vst [vmem:[%s195] sm:$0xff] %v196
                  %v198 = vld [vmem:[%s194 + $0x10] sm:$0xff]
                  %199 = vst [vmem:[%s195 + $0x8] sm:$0xff] %v198
                  %v200 = vld [vmem:[%s194 + $0x20] sm:$0xff]
                  %201 = vst [vmem:[%s195 + $0x10] sm:$0xff] %v200
                  %v202 = vld [vmem:[%s194 + $0x30] sm:$0xff]
                  %203 = vst [vmem:[%s195 + $0x18] sm:$0xff] %v202
                  %v204 = vld [vmem:[%s194 + $0x40] sm:$0xff]
                  %205 = vst [vmem:[%s195 + $0x20] sm:$0xff] %v204
                  %v206 = vld [vmem:[%s194 + $0x50] sm:$0xff]
                  %207 = vst [vmem:[%s195 + $0x28] sm:$0xff] %v206
                  %v208 = vld [vmem:[%s194 + $0x60] sm:$0xff]
                  %209 = vst [vmem:[%s195 + $0x30] sm:$0xff] %v208
                  %v210 = vld [vmem:[%s194 + $0x70] sm:$0xff]
                  %211 = vst [vmem:[%s195 + $0x38] sm:$0xff] %v210
                  %v212 = vld [vmem:[%s194 + $0x80] sm:$0xff]
                  %213 = vst [vmem:[%s195 + $0x40] sm:$0xff] %v212
                  %v214 = vld [vmem:[%s194 + $0x90] sm:$0xff]
                  %215 = vst [vmem:[%s195 + $0x48] sm:$0xff] %v214
                  %v216 = vld [vmem:[%s194 + $0xa0] sm:$0xff]
                  %217 = vst [vmem:[%s195 + $0x50] sm:$0xff] %v216
                  %v218 = vld [vmem:[%s194 + $0xb0] sm:$0xff]
                  %219 = vst [vmem:[%s195 + $0x58] sm:$0xff] %v218
                  %v220 = vld [vmem:[%s194 + $0xc0] sm:$0xff]
                  %221 = vst [vmem:[%s195 + $0x60] sm:$0xff] %v220
                  %v222 = vld [vmem:[%s194 + $0xd0] sm:$0xff]
                  %223 = vst [vmem:[%s195 + $0x68] sm:$0xff] %v222
                  %v224 = vld [vmem:[%s194 + $0xe0] sm:$0xff]
                  %225 = vst [vmem:[%s195 + $0x70] sm:$0xff] %v224
                  %v226 = vld [vmem:[%s194 + $0xf0] sm:$0xff]
                  %227 = vst [vmem:[%s195 + $0x78] sm:$0xff] %v226
                $region56: #{discriminator_forward.5} parent=50 // loop_footer
                  %s193 = sadd.s32 1, %s189
                $region57: #{discriminator_forward.5} parent=50 // loop_footer_branch
                  %188 = sbr.rel target = $region53
                $region58: #{discriminator_forward.5} parent=50 // loop_exit
                  _
              $region51: #{discriminator_forward.5} parent=35 // pred_fallthru
                _
              // Predicated region
              $region59: #{discriminator_forward.5} parent=35 // pred_check
                _
              $region60: #{discriminator_forward.5} parent=35 // pred_check_branch
                %229 = sbr.rel target = $region62
              $region61: #{discriminator_forward.5} parent=35 // pred_region
                _
              $region62: #{discriminator_forward.5} parent=35 // pred_fallthru
                _
            $region36: #{discriminator_forward.5} parent=31 // pred_fallthru
              _
            // Predicated region
            $region37: #{discriminator_forward.5} parent=31 // pred_check
              _
            $region38: #{discriminator_forward.5} parent=31 // pred_check_branch
              %143 = sbr.rel target = $region40
            $region39: #{discriminator_forward.5} parent=31 // pred_region
              %s145 = ssub.s32 256, 1
              loop: start=0, step=1, limit=1
              $region41: #{discriminator_forward.5} parent=39 // loop_pre_header
                _
              $region42: #{discriminator_forward.5} parent=39 // loop_header
                %s147 = sphi 0, %s151
                %p148 = scmp.ge.s32.totalorder %s147, 1
                %s152 = sphi %s137, %s137
                %s153 = sphi %s134, %s134
              $region43: #{discriminator_forward.5} parent=39 // loop_header_branch
                %150 = sbr.rel (%p148) target = $region47
              $region44: #{discriminator_forward.5} parent=39 // loop_body
                %v154 = vld [vmem:[%s152] sm:%s145]
                %155 = vst [vmem:[%s153] sm:%s145] %v154
                %v156 = vld [vmem:[%s152 + $0x10] sm:%s145]
                %157 = vst [vmem:[%s153 + $0x8] sm:%s145] %v156
                %v158 = vld [vmem:[%s152 + $0x20] sm:%s145]
                %159 = vst [vmem:[%s153 + $0x10] sm:%s145] %v158
                %v160 = vld [vmem:[%s152 + $0x30] sm:%s145]
                %161 = vst [vmem:[%s153 + $0x18] sm:%s145] %v160
                %v162 = vld [vmem:[%s152 + $0x40] sm:%s145]
                %163 = vst [vmem:[%s153 + $0x20] sm:%s145] %v162
                %v164 = vld [vmem:[%s152 + $0x50] sm:%s145]
                %165 = vst [vmem:[%s153 + $0x28] sm:%s145] %v164
                %v166 = vld [vmem:[%s152 + $0x60] sm:%s145]
                %167 = vst [vmem:[%s153 + $0x30] sm:%s145] %v166
                %v168 = vld [vmem:[%s152 + $0x70] sm:%s145]
                %169 = vst [vmem:[%s153 + $0x38] sm:%s145] %v168
                %v170 = vld [vmem:[%s152 + $0x80] sm:%s145]
                %171 = vst [vmem:[%s153 + $0x40] sm:%s145] %v170
                %v172 = vld [vmem:[%s152 + $0x90] sm:%s145]
                %173 = vst [vmem:[%s153 + $0x48] sm:%s145] %v172
                %v174 = vld [vmem:[%s152 + $0xa0] sm:%s145]
                %175 = vst [vmem:[%s153 + $0x50] sm:%s145] %v174
                %v176 = vld [vmem:[%s152 + $0xb0] sm:%s145]
                %177 = vst [vmem:[%s153 + $0x58] sm:%s145] %v176
                %v178 = vld [vmem:[%s152 + $0xc0] sm:%s145]
                %179 = vst [vmem:[%s153 + $0x60] sm:%s145] %v178
                %v180 = vld [vmem:[%s152 + $0xd0] sm:%s145]
                %181 = vst [vmem:[%s153 + $0x68] sm:%s145] %v180
                %v182 = vld [vmem:[%s152 + $0xe0] sm:%s145]
                %183 = vst [vmem:[%s153 + $0x70] sm:%s145] %v182
                %v184 = vld [vmem:[%s152 + $0xf0] sm:%s145]
                %185 = vst [vmem:[%s153 + $0x78] sm:%s145] %v184
              $region45: #{discriminator_forward.5} parent=39 // loop_footer
                %s151 = sadd.s32 1, %s147
              $region46: #{discriminator_forward.5} parent=39 // loop_footer_branch
                %146 = sbr.rel target = $region42
              $region47: #{discriminator_forward.5} parent=39 // loop_exit
                _
            $region40: #{discriminator_forward.5} parent=31 // pred_fallthru
              _
          $region32: #{discriminator_forward.5} parent=27 // pred_fallthru
            _
          %230 = vnop
        $region28: #{discriminator_forward.5} parent=23 // pred_fallthru
          _
      $region24: #{discriminator_forward.5} parent=5 // pred_fallthru
        _
      %p231 = scmp.le.s32.totalorder 1, %s9
      %p232 = scmp.lt.s32.totalorder %s9, 3
      %p233 = pnand %p231, %p232
      %p234 = pneg %p233
      // Predicated region
      $region63: #{discriminator_forward.5} parent=5 // pred_check
        _
      $region64: #{discriminator_forward.5} parent=5 // pred_check_branch
        %236 = sbr.rel (%p233) target = $region66
      $region65: #{discriminator_forward.5} parent=5 // pred_region
        %s237 = ssub.s32 %s9, 1
        %s238 = sand.u32 %s22, 1
        %s239 = sand.u32 %s22, 1
        %s240 = smul.addr %s239, 128
        %s241 = scalar_lea.vmem [#allocation2], %s240
        // Predicated region
        $region67: #{discriminator_forward.5} parent=65 // pred_check
          %p242 = pneg %p35
        $region68: #{discriminator_forward.5} parent=65 // pred_check_branch
          %244 = sbr.rel (%p242) target = $region70
        $region69: #{discriminator_forward.5} parent=65 // pred_region
          _
        $region70: #{discriminator_forward.5} parent=65 // pred_fallthru
          _
        %s245 = sand.u32 %s22, 1
        %s246 = sand.u32 %s22, 1
        %s247 = smul.addr %s246, 128
        %s248 = scalar_lea.vmem [#allocation2], %s247
        %p249 = pneg %p35
        %p250 = pneg %p32
        %p251 = pneg %p56
        %p252 = pneg %p53
        %p253 = pneg %p77
        %p254 = pneg %p74
        %p255 = pneg %p103
        %p256 = pneg %p100
        %s257 = sand.u32 %s90, 1
        %s258 = sand.u32 %s90, 1
        %s259 = smul.addr %s258, 16
        %s260 = scalar_lea.vmem [#allocation3], %s259
        %s261 = smul.u32 2, %s14
        %s262 = smul.u32 2, %s14
        %v263 = vld [vmem:[%s1] sm:$0xf]
        %v264 = vld [vmem:[%s1 + $0x4] sm:$0xf]
        %v265 = vld [vmem:[%s241] sm:$0xff]
        %v266 = vld [vmem:[%s241 + $0x8] sm:$0xff]
        %v267 = vld [vmem:[%s241 + $0x10] sm:$0xff]
        %v268 = vld [vmem:[%s241 + $0x18] sm:$0xff]
        %v269 = vld [vmem:[%s241 + $0x20] sm:$0xff]
        %v270 = vld [vmem:[%s241 + $0x28] sm:$0xff]
        %v271 = vld [vmem:[%s241 + $0x30] sm:$0xff]
        %v272 = vld [vmem:[%s241 + $0x38] sm:$0xff]
        %v273 = vld [vmem:[%s241 + $0x40] sm:$0xff]
        %v274 = vld [vmem:[%s241 + $0x48] sm:$0xff]
        %v275 = vld [vmem:[%s241 + $0x50] sm:$0xff]
        %v276 = vld [vmem:[%s241 + $0x58] sm:$0xff]
        %v277 = vld [vmem:[%s241 + $0x60] sm:$0xff]
        %v278 = vld [vmem:[%s241 + $0x68] sm:$0xff]
        %v279 = vld [vmem:[%s241 + $0x70] sm:$0xff]
        %v280 = vld [vmem:[%s241 + $0x78] sm:$0xff]
        %v281 = vld [vmem:[%s2] sm:$0xff]
        %v282 = vld [vmem:[%s2 + $0x8] sm:$0xff]
        %284 = vset.pattern.permute.xlu0 0
        %285 = vperm.xlu0 %284, %v281
        %v286 = vpop.permute.xlu0 %285
        %289 = vset.pattern.permute.xlu0 0
        %290 = vperm.xlu0 %289, %v282
        %v291 = vpop.permute.xlu0 %290
        %v295 = vunpack.c.l.b16 %v263
        %v296 = vunpack.c.l.b16 %v264
        %v297 = vpack.c.b16 %v296, %v295
        %v315 = vunpack.c.l.b16 %v265
        %v316 = vunpack.c.h.b16 %v265
        %v317 = vunpack.c.l.b16 %v266
        %v318 = vunpack.c.h.b16 %v266
        %v319 = vunpack.c.l.b16 %v267
        %v320 = vunpack.c.h.b16 %v267
        %v321 = vunpack.c.l.b16 %v268
        %v322 = vunpack.c.h.b16 %v268
        %v323 = vunpack.c.l.b16 %v269
        %v324 = vunpack.c.h.b16 %v269
        %v325 = vunpack.c.l.b16 %v270
        %v326 = vunpack.c.h.b16 %v270
        %v327 = vunpack.c.l.b16 %v271
        %v328 = vunpack.c.h.b16 %v271
        %v329 = vunpack.c.l.b16 %v272
        %v330 = vunpack.c.h.b16 %v272
        %v331 = vunpack.c.l.b16 %v273
        %v332 = vunpack.c.h.b16 %v273
        %v333 = vunpack.c.l.b16 %v274
        %v334 = vunpack.c.h.b16 %v274
        %v335 = vunpack.c.l.b16 %v275
        %v336 = vunpack.c.h.b16 %v275
        %v337 = vunpack.c.l.b16 %v276
        %v338 = vunpack.c.h.b16 %v276
        %v339 = vunpack.c.l.b16 %v277
        %v340 = vunpack.c.h.b16 %v277
        %v341 = vunpack.c.l.b16 %v278
        %v342 = vunpack.c.h.b16 %v278
        %v343 = vunpack.c.l.b16 %v279
        %v344 = vunpack.c.h.b16 %v279
        %v345 = vunpack.c.l.b16 %v280
        %v346 = vunpack.c.h.b16 %v280
        %v347 = vpack.c.b16 %v317, %v315
        %v348 = vpack.c.b16 %v318, %v316
        %v349 = vpack.c.b16 %v321, %v319
        %v350 = vpack.c.b16 %v322, %v320
        %v351 = vpack.c.b16 %v325, %v323
        %v352 = vpack.c.b16 %v326, %v324
        %v353 = vpack.c.b16 %v329, %v327
        %v354 = vpack.c.b16 %v330, %v328
        %v355 = vpack.c.b16 %v333, %v331
        %v356 = vpack.c.b16 %v334, %v332
        %v357 = vpack.c.b16 %v337, %v335
        %v358 = vpack.c.b16 %v338, %v336
        %v359 = vpack.c.b16 %v341, %v339
        %v360 = vpack.c.b16 %v342, %v340
        %v361 = vpack.c.b16 %v345, %v343
        %v362 = vpack.c.b16 %v346, %v344
        %379 = vmatpush.bf16.msra.mxu0 %v361
        %380 = vmatpush.bf16.msra.mxu0 %v359
        %381 = vmatpush.bf16.msra.mxu0 %v357
        %382 = vmatpush.bf16.msra.mxu0 %v355
        %383 = vmatpush.bf16.msra.mxu0 %v353
        %384 = vmatpush.bf16.msra.mxu0 %v351
        %385 = vmatpush.bf16.msra.mxu0 %v349
        %386 = vmatpush.bf16.msra.mxu0 %v347
        %387 = vmatmul.bf16.gmra.mxu0 %v297
        %v388 = vpop.f32.mrf.mxu0
        %v389 = vadd.f32 %v286, %v388
        %v390 = vpop.f32.mrf.mxu0
        %v391 = vadd.f32 %v291, %v390
        %392 = vdwg.mxu0
        %393 = vmatpush.bf16.msra.mxu0 %v362
        %394 = vmatpush.bf16.msra.mxu0 %v360
        %395 = vmatpush.bf16.msra.mxu0 %v358
        %396 = vmatpush.bf16.msra.mxu0 %v356
        %397 = vmatpush.bf16.msra.mxu0 %v354
        %398 = vmatpush.bf16.msra.mxu0 %v352
        %399 = vmatpush.bf16.msra.mxu0 %v350
        %400 = vmatpush.bf16.msra.mxu0 %v348
        %401 = vmatmul.bf16.gmra.mxu0 %v297
        %v402 = vpop.f32.mrf.mxu0
        %v403 = vadd.f32 %v286, %v402
        %v404 = vpop.f32.mrf.mxu0
        %v405 = vadd.f32 %v291, %v404
        %406 = vdwg.mxu0
        %vm407 = vcmp.ge.f32.partialorder %v389, 0.0
        %vm408 = vcmp.ge.f32.partialorder %v403, 0.0
        %vm409 = vcmp.ge.f32.partialorder %v391, 0.0
        %vm410 = vcmp.ge.f32.partialorder %v405, 0.0
        %v411 = vmul.f32 %v389, 0.2
        %v412 = vmul.f32 %v403, 0.2
        %v413 = vmul.f32 %v391, 0.2
        %v414 = vmul.f32 %v405, 0.2
        %v415 = vsel %vm407, %v389, %v411
        %v416 = vsel %vm408, %v403, %v412
        %v417 = vsel %vm409, %v391, %v413
        %v418 = vsel %vm410, %v405, %v414
        %v419 = vpack.c.bf16 %v416, %v415
        %v420 = vpack.c.bf16 %v418, %v417
        %421 = vst [vmem:[%s260] sm:$0xff] %v419
        %422 = vst [vmem:[%s260 + $0x8] sm:$0xff] %v420
        %s423 = sand.u32 %s90, 1
        %s424 = sand.u32 %s90, 1
        %s425 = smul.addr %s424, 16
        %s426 = scalar_lea.vmem [#allocation3], %s425
        // Predicated region
        $region71: #{discriminator_forward.5} parent=65 // pred_check
          %p427 = pneg %p100
        $region72: #{discriminator_forward.5} parent=65 // pred_check_branch
          %429 = sbr.rel (%p427) target = $region74
        $region73: #{discriminator_forward.5} parent=65 // pred_region
          %s430 = smul.u32 2, %s14
          %s431 = smul.addr %s430, 4
          %s432 = scalar_lea.vmem %s3, %s431
          // Predicated region
          $region75: #{discriminator_forward.5} parent=73 // pred_check
            _
          $region76: #{discriminator_forward.5} parent=73 // pred_check_branch
            %434 = sbr.rel (0) target = $region78
          $region77: #{discriminator_forward.5} parent=73 // pred_region
            // Predicated region
            $region79: #{discriminator_forward.5} parent=77 // pred_check
              _
            $region80: #{discriminator_forward.5} parent=77 // pred_check_branch
              %436 = sbr.rel (0) target = $region82
            $region81: #{discriminator_forward.5} parent=77 // pred_region
              // Predicated region
              $region94: #{discriminator_forward.5} parent=81 // pred_check
                _
              $region95: #{discriminator_forward.5} parent=81 // pred_check_branch
                %454 = sbr.rel (0) target = $region97
              $region96: #{discriminator_forward.5} parent=81 // pred_region
                loop: start=0, step=1, limit=1
                $region98: #{discriminator_forward.5} parent=96 // loop_pre_header
                  _
                $region99: #{discriminator_forward.5} parent=96 // loop_header
                  %s456 = sphi 0, %s460
                  %p457 = scmp.ge.s32.totalorder %s456, 1
                  %s461 = sphi %s426, %s426
                  %s462 = sphi %s432, %s432
                $region100: #{discriminator_forward.5} parent=96 // loop_header_branch
                  %459 = sbr.rel (%p457) target = $region104
                $region101: #{discriminator_forward.5} parent=96 // loop_body
                  %v463 = vld [vmem:[%s461] sm:$0xff]
                  %464 = vst [vmem:[%s462] sm:$0xff] %v463
                  %v465 = vld [vmem:[%s461 + $0x8] sm:$0xff]
                  %466 = vst [vmem:[%s462 + $0x10] sm:$0xff] %v465
                $region102: #{discriminator_forward.5} parent=96 // loop_footer
                  %s460 = sadd.s32 1, %s456
                $region103: #{discriminator_forward.5} parent=96 // loop_footer_branch
                  %455 = sbr.rel target = $region99
                $region104: #{discriminator_forward.5} parent=96 // loop_exit
                  _
              $region97: #{discriminator_forward.5} parent=81 // pred_fallthru
                _
              // Predicated region
              $region105: #{discriminator_forward.5} parent=81 // pred_check
                _
              $region106: #{discriminator_forward.5} parent=81 // pred_check_branch
                %468 = sbr.rel target = $region108
              $region107: #{discriminator_forward.5} parent=81 // pred_region
                _
              $region108: #{discriminator_forward.5} parent=81 // pred_fallthru
                _
            $region82: #{discriminator_forward.5} parent=77 // pred_fallthru
              _
            // Predicated region
            $region83: #{discriminator_forward.5} parent=77 // pred_check
              _
            $region84: #{discriminator_forward.5} parent=77 // pred_check_branch
              %438 = sbr.rel target = $region86
            $region85: #{discriminator_forward.5} parent=77 // pred_region
              %s440 = ssub.s32 256, 1
              loop: start=0, step=1, limit=1
              $region87: #{discriminator_forward.5} parent=85 // loop_pre_header
                _
              $region88: #{discriminator_forward.5} parent=85 // loop_header
                %s442 = sphi 0, %s446
                %p443 = scmp.ge.s32.totalorder %s442, 1
                %s447 = sphi %s426, %s426
                %s448 = sphi %s432, %s432
              $region89: #{discriminator_forward.5} parent=85 // loop_header_branch
                %445 = sbr.rel (%p443) target = $region93
              $region90: #{discriminator_forward.5} parent=85 // loop_body
                %v449 = vld [vmem:[%s447] sm:%s440]
                %450 = vst [vmem:[%s448] sm:%s440] %v449
                %v451 = vld [vmem:[%s447 + $0x8] sm:%s440]
                %452 = vst [vmem:[%s448 + $0x10] sm:%s440] %v451
              $region91: #{discriminator_forward.5} parent=85 // loop_footer
                %s446 = sadd.s32 1, %s442
              $region92: #{discriminator_forward.5} parent=85 // loop_footer_branch
                %441 = sbr.rel target = $region88
              $region93: #{discriminator_forward.5} parent=85 // loop_exit
                _
            $region86: #{discriminator_forward.5} parent=77 // pred_fallthru
              _
          $region78: #{discriminator_forward.5} parent=73 // pred_fallthru
            _
          %469 = vnop
        $region74: #{discriminator_forward.5} parent=65 // pred_fallthru
          _
      $region66: #{discriminator_forward.5} parent=5 // pred_fallthru
        _
      %p470 = scmp.le.s32.totalorder 2, %s9
      // Predicated region
      $region109: #{discriminator_forward.5} parent=5 // pred_check
        %p471 = pneg %p470
      $region110: #{discriminator_forward.5} parent=5 // pred_check_branch
        %473 = sbr.rel (%p471) target = $region112
      $region111: #{discriminator_forward.5} parent=5 // pred_region
        %s474 = ssub.s32 %s9, 2
        // Predicated region
        $region113: #{discriminator_forward.5} parent=111 // pred_check
          %p475 = pneg %p106
        $region114: #{discriminator_forward.5} parent=111 // pred_check_branch
          %477 = sbr.rel (%p475) target = $region116
        $region115: #{discriminator_forward.5} parent=111 // pred_region
          %s478 = sand.u32 %s91, 1
          %s479 = sand.u32 %s91, 1
          %s480 = smul.addr %s479, 16
          %s481 = scalar_lea.vmem [#allocation3], %s480
        $region116: #{discriminator_forward.5} parent=111 // pred_fallthru
          _
      $region112: #{discriminator_forward.5} parent=5 // pred_fallthru
        _
    $region6: #{discriminator_forward.5} parent=1 // loop_footer
      %s13 = sadd.s32 1, %s9
    $region7: #{discriminator_forward.5} parent=1 // loop_footer_branch
      %8 = sbr.rel target = $region3
    $region8: #{discriminator_forward.5} parent=1 // loop_exit
      _

// kernel: discriminator_forward.6
$region0: #{discriminator_forward.6}
  #allocation0 [shape = 'u32[]', space=smem, size = 0x4, offset = 0x4, fixed_abs, tag = 'smem constant byte address 0x4 - core index']
  #allocation1 [shape = 'u32[72,128]{1,0:T(1,128)}', space=vmem, size = 0x9000, scoped, tag = 'internal scratch']
  %s0 = inlined_call_operand.vmem [shape: bf16[256,128], index: 0, kind: input, shape index: {}]
  %s1 = inlined_call_operand.vmem [shape: bf16[32,256], index: 1, kind: input, shape index: {}]
  %s2 = inlined_call_operand.vmem [shape: f32[32,1], index: 2, kind: input, shape index: {}]
  %s3 = inlined_call_operand.vmem [shape: bf16[32,128], index: 3, kind: output, shape index: {}]
  %s4 = sld [smem:[#allocation0]]
  $region22: #{discriminator_forward.6} parent=0
    _
  %s6 = ssub.s32 1, %s4
  %s7 = scalar_select 0, %s6, %s4
  // Predicated region
  $region2: #{discriminator_forward.6} parent=0 // pred_check
    _
  $region3: #{discriminator_forward.6} parent=0 // pred_check_branch
    %9 = sbr.rel (0) target = $region5
  $region4: #{discriminator_forward.6} parent=0 // pred_region
    _
  $region5: #{discriminator_forward.6} parent=0 // pred_fallthru
    _
  // Predicated region
  $region6: #{discriminator_forward.6} parent=0 // pred_check
    _
  $region7: #{discriminator_forward.6} parent=0 // pred_check_branch
    %11 = sbr.rel (0) target = $region9
  $region8: #{discriminator_forward.6} parent=0 // pred_region
    _
  $region9: #{discriminator_forward.6} parent=0 // pred_fallthru
    _
  // Predicated region
  $region10: #{discriminator_forward.6} parent=0 // pred_check
    _
  $region11: #{discriminator_forward.6} parent=0 // pred_check_branch
    %13 = sbr.rel (0) target = $region13
  $region12: #{discriminator_forward.6} parent=0 // pred_region
    _
  $region13: #{discriminator_forward.6} parent=0 // pred_fallthru
    _
  %v14 = vld [vmem:[%s1] sm:$0xff]
  %v15 = vld [vmem:[%s1 + $0x8] sm:$0xff]
  %v16 = vld [vmem:[%s1 + $0x10] sm:$0xff]
  %v17 = vld [vmem:[%s1 + $0x18] sm:$0xff]
  %v18 = vld [vmem:[%s0] sm:$0xf]
  %v19 = vld [vmem:[%s0 + $0x4] sm:$0xf]
  %v20 = vld [vmem:[%s0 + $0x8] sm:$0xf]
  %v21 = vld [vmem:[%s0 + $0xc] sm:$0xf]
  %v22 = vld [vmem:[%s0 + $0x10] sm:$0xf]
  %v23 = vld [vmem:[%s0 + $0x14] sm:$0xf]
  %v24 = vld [vmem:[%s0 + $0x18] sm:$0xf]
  %v25 = vld [vmem:[%s0 + $0x1c] sm:$0xf]
  %v26 = vld [vmem:[%s0 + $0x20] sm:$0xf]
  %v27 = vld [vmem:[%s0 + $0x24] sm:$0xf]
  %v28 = vld [vmem:[%s0 + $0x28] sm:$0xf]
  %v29 = vld [vmem:[%s0 + $0x2c] sm:$0xf]
  %v30 = vld [vmem:[%s0 + $0x30] sm:$0xf]
  %v31 = vld [vmem:[%s0 + $0x34] sm:$0xf]
  %v32 = vld [vmem:[%s0 + $0x38] sm:$0xf]
  %v33 = vld [vmem:[%s0 + $0x3c] sm:$0xf]
  %v34 = vld [vmem:[%s0 + $0x40] sm:$0xf]
  %v35 = vld [vmem:[%s0 + $0x44] sm:$0xf]
  %v36 = vld [vmem:[%s0 + $0x48] sm:$0xf]
  %v37 = vld [vmem:[%s0 + $0x4c] sm:$0xf]
  %v38 = vld [vmem:[%s0 + $0x50] sm:$0xf]
  %v39 = vld [vmem:[%s0 + $0x54] sm:$0xf]
  %v40 = vld [vmem:[%s0 + $0x58] sm:$0xf]
  %v41 = vld [vmem:[%s0 + $0x5c] sm:$0xf]
  %v42 = vld [vmem:[%s0 + $0x60] sm:$0xf]
  %v43 = vld [vmem:[%s0 + $0x64] sm:$0xf]
  %v44 = vld [vmem:[%s0 + $0x68] sm:$0xf]
  %v45 = vld [vmem:[%s0 + $0x6c] sm:$0xf]
  %v46 = vld [vmem:[%s0 + $0x70] sm:$0xf]
  %v47 = vld [vmem:[%s0 + $0x74] sm:$0xf]
  %v48 = vld [vmem:[%s0 + $0x78] sm:$0xf]
  %v49 = vld [vmem:[%s0 + $0x7c] sm:$0xf]
  %v50 = vld [vmem:[%s2] sm:$0xff]
  %v51 = vld [vmem:[%s2 + $0x8] sm:$0xff]
  %v52 = vld [vmem:[%s2 + $0x10] sm:$0xff]
  %v53 = vld [vmem:[%s2 + $0x18] sm:$0xff]
  %55 = vset.pattern.permute.xlu0 0
  %56 = vperm.xlu0 %55, %v50
  %v57 = vpop.permute.xlu0 %56
  %60 = vset.pattern.permute.xlu0 0
  %61 = vperm.xlu0 %60, %v51
  %v62 = vpop.permute.xlu0 %61
  %65 = vset.pattern.permute.xlu0 0
  %66 = vperm.xlu0 %65, %v52
  %v67 = vpop.permute.xlu0 %66
  %70 = vset.pattern.permute.xlu0 0
  %71 = vperm.xlu0 %70, %v53
  %v72 = vpop.permute.xlu0 %71
  %v78 = vunpack.c.l.b16 %v14
  %v79 = vunpack.c.h.b16 %v14
  %v80 = vunpack.c.l.b16 %v15
  %v81 = vunpack.c.h.b16 %v15
  %v82 = vunpack.c.l.b16 %v16
  %v83 = vunpack.c.h.b16 %v16
  %v84 = vunpack.c.l.b16 %v17
  %v85 = vunpack.c.h.b16 %v17
  %v86 = vpack.c.b16 %v80, %v78
  %v87 = vpack.c.b16 %v81, %v79
  %v88 = vpack.c.b16 %v84, %v82
  %v89 = vpack.c.b16 %v85, %v83
  %v126 = vunpack.c.l.b16 %v18
  %v127 = vunpack.c.l.b16 %v19
  %v128 = vunpack.c.l.b16 %v20
  %v129 = vunpack.c.l.b16 %v21
  %v130 = vunpack.c.l.b16 %v22
  %v131 = vunpack.c.l.b16 %v23
  %v132 = vunpack.c.l.b16 %v24
  %v133 = vunpack.c.l.b16 %v25
  %v134 = vunpack.c.l.b16 %v26
  %v135 = vunpack.c.l.b16 %v27
  %v136 = vunpack.c.l.b16 %v28
  %v137 = vunpack.c.l.b16 %v29
  %v138 = vunpack.c.l.b16 %v30
  %v139 = vunpack.c.l.b16 %v31
  %v140 = vunpack.c.l.b16 %v32
  %v141 = vunpack.c.l.b16 %v33
  %v142 = vunpack.c.l.b16 %v34
  %v143 = vunpack.c.l.b16 %v35
  %v144 = vunpack.c.l.b16 %v36
  %v145 = vunpack.c.l.b16 %v37
  %v146 = vunpack.c.l.b16 %v38
  %v147 = vunpack.c.l.b16 %v39
  %v148 = vunpack.c.l.b16 %v40
  %v149 = vunpack.c.l.b16 %v41
  %v150 = vunpack.c.l.b16 %v42
  %v151 = vunpack.c.l.b16 %v43
  %v152 = vunpack.c.l.b16 %v44
  %v153 = vunpack.c.l.b16 %v45
  %v154 = vunpack.c.l.b16 %v46
  %v155 = vunpack.c.l.b16 %v47
  %v156 = vunpack.c.l.b16 %v48
  %v157 = vunpack.c.l.b16 %v49
  %v158 = vpack.c.b16 %v127, %v126
  %v159 = vpack.c.b16 %v129, %v128
  %v160 = vpack.c.b16 %v131, %v130
  %v161 = vpack.c.b16 %v133, %v132
  %v162 = vpack.c.b16 %v135, %v134
  %v163 = vpack.c.b16 %v137, %v136
  %v164 = vpack.c.b16 %v139, %v138
  %v165 = vpack.c.b16 %v141, %v140
  %v166 = vpack.c.b16 %v143, %v142
  %v167 = vpack.c.b16 %v145, %v144
  %v168 = vpack.c.b16 %v147, %v146
  %v169 = vpack.c.b16 %v149, %v148
  %v170 = vpack.c.b16 %v151, %v150
  %v171 = vpack.c.b16 %v153, %v152
  %v172 = vpack.c.b16 %v155, %v154
  %v173 = vpack.c.b16 %v157, %v156
  %190 = vmatpush.bf16.msra.mxu0 %v165
  %191 = vmatpush.bf16.msra.mxu0 %v164
  %192 = vmatpush.bf16.msra.mxu0 %v163
  %193 = vmatpush.bf16.msra.mxu0 %v162
  %194 = vmatpush.bf16.msra.mxu0 %v161
  %195 = vmatpush.bf16.msra.mxu0 %v160
  %196 = vmatpush.bf16.msra.mxu0 %v159
  %197 = vmatpush.bf16.msra.mxu0 %v158
  %198 = vmatmul.bf16.gmra.mxu0 %v86
  %v199 = vpop.f32.mrf.mxu0
  %v200 = vadd.f32 %v57, %v199
  %v201 = vpop.f32.mrf.mxu0
  %v202 = vadd.f32 %v62, %v201
  %203 = vmatmul.bf16.gmra.mxu0 %v88
  %v204 = vpop.f32.mrf.mxu0
  %v205 = vadd.f32 %v67, %v204
  %v206 = vpop.f32.mrf.mxu0
  %v207 = vadd.f32 %v72, %v206
  %208 = vdwg.mxu0
  %209 = vmatpush.bf16.msra.mxu0 %v173
  %210 = vmatpush.bf16.msra.mxu0 %v172
  %211 = vmatpush.bf16.msra.mxu0 %v171
  %212 = vmatpush.bf16.msra.mxu0 %v170
  %213 = vmatpush.bf16.msra.mxu0 %v169
  %214 = vmatpush.bf16.msra.mxu0 %v168
  %215 = vmatpush.bf16.msra.mxu0 %v167
  %216 = vmatpush.bf16.msra.mxu0 %v166
  %217 = vmatmul.bf16.gmra.mxu0 %v87
  %v218 = vpop.f32.mrf.mxu0
  %v219 = vadd.f32 %v200, %v218
  %v220 = vpop.f32.mrf.mxu0
  %v221 = vadd.f32 %v202, %v220
  %222 = vmatmul.bf16.gmra.mxu0 %v89
  %v223 = vpop.f32.mrf.mxu0
  %v224 = vadd.f32 %v205, %v223
  %v225 = vpop.f32.mrf.mxu0
  %v226 = vadd.f32 %v207, %v225
  %227 = vdwg.mxu0
  %vm228 = vcmp.ge.f32.partialorder %v219, 0.0
  %vm229 = vcmp.ge.f32.partialorder %v221, 0.0
  %vm230 = vcmp.ge.f32.partialorder %v224, 0.0
  %vm231 = vcmp.ge.f32.partialorder %v226, 0.0
  %v232 = vmul.f32 %v219, 0.2
  %v233 = vmul.f32 %v221, 0.2
  %v234 = vmul.f32 %v224, 0.2
  %v235 = vmul.f32 %v226, 0.2
  %v236 = vsel %vm228, %v219, %v232
  %v237 = vsel %vm229, %v221, %v233
  %v238 = vsel %vm230, %v224, %v234
  %v239 = vsel %vm231, %v226, %v235
  %v240 = vpack.c.bf16 %v236, %v236
  %v241 = vpack.c.bf16 %v237, %v237
  %v242 = vpack.c.bf16 %v238, %v238
  %v243 = vpack.c.bf16 %v239, %v239
  %244 = vst [vmem:[%s3] sm:$0xf] %v240
  %245 = vst [vmem:[%s3 + $0x4] sm:$0xf] %v241
  %246 = vst [vmem:[%s3 + $0x8] sm:$0xf] %v242
  %247 = vst [vmem:[%s3 + $0xc] sm:$0xf] %v243
  // Predicated region
  $region14: #{discriminator_forward.6} parent=0 // pred_check
    _
  $region15: #{discriminator_forward.6} parent=0 // pred_check_branch
    %249 = sbr.rel (0) target = $region17
  $region16: #{discriminator_forward.6} parent=0 // pred_region
    _
  $region17: #{discriminator_forward.6} parent=0 // pred_fallthru
    _
  // Predicated region
  $region18: #{discriminator_forward.6} parent=0 // pred_check
    _
  $region19: #{discriminator_forward.6} parent=0 // pred_check_branch
    %251 = sbr.rel (0) target = $region21
  $region20: #{discriminator_forward.6} parent=0 // pred_region
    _
  $region21: #{discriminator_forward.6} parent=0 // pred_fallthru
    _

// kernel: discriminator_forward.7
$region0: #{discriminator_forward.7}
  #allocation0 [shape = 'u32[]', space=smem, size = 0x4, offset = 0x4, fixed_abs, tag = 'smem constant byte address 0x4 - core index']
  #allocation1 [shape = 'u32[72,128]{1,0:T(1,128)}', space=vmem, size = 0x9000, scoped, tag = 'internal scratch']
  %s0 = inlined_call_operand.vmem [shape: bf16[512,32], index: 0, kind: input, shape index: {}]
  %s1 = inlined_call_operand.vmem [shape: bf16[64,512], index: 1, kind: input, shape index: {}]
  %s2 = inlined_call_operand.vmem [shape: f32[64,1], index: 2, kind: input, shape index: {}]
  %s3 = inlined_call_operand.vmem [shape: f32[64,32], index: 3, kind: input, shape index: {}]
  %s4 = inlined_call_operand.vmem [shape: f32[32,2], index: 4, kind: input, shape index: {}]
  %s5 = inlined_call_operand.vmem [shape: f32[64,32], index: 5, kind: output, shape index: {0}]
  %s6 = inlined_call_operand.hbm [shape: f32[1,2], index: 6, kind: output, shape index: {1}]
  %7 = xla_tuple %s5, %s6
  %s8 = sld [smem:[#allocation0]]
  $region38: #{discriminator_forward.7} parent=0
    _
  %s10 = ssub.s32 1, %s8
  %s11 = scalar_select 0, %s10, %s8
  $region1: #{discriminator_forward.7} parent=0
    #allocation2 [shape = 'u8[512]{0}', space=vmem, size = 0x400, scoped, tag = 'output window, operand 1, single buffered']
    #allocation3 [shape = 's32[1]{0}', space=sflag, size = 0x4, scoped, tag = 'scoped memory for discriminator_forward.7']
    %12 = vsyncpa [#allocation3], 0
    // Predicated region
    $region2: #{discriminator_forward.7} parent=1 // pred_check
      _
    $region3: #{discriminator_forward.7} parent=1 // pred_check_branch
      %14 = sbr.rel (0) target = $region5
    $region4: #{discriminator_forward.7} parent=1 // pred_region
      _
    $region5: #{discriminator_forward.7} parent=1 // pred_fallthru
      _
    // Predicated region
    $region6: #{discriminator_forward.7} parent=1 // pred_check
      _
    $region7: #{discriminator_forward.7} parent=1 // pred_check_branch
      %16 = sbr.rel (0) target = $region9
    $region8: #{discriminator_forward.7} parent=1 // pred_region
      _
    $region9: #{discriminator_forward.7} parent=1 // pred_fallthru
      _
    // Predicated region
    $region10: #{discriminator_forward.7} parent=1 // pred_check
      _
    $region11: #{discriminator_forward.7} parent=1 // pred_check_branch
      %18 = sbr.rel (0) target = $region13
    $region12: #{discriminator_forward.7} parent=1 // pred_region
      _
    $region13: #{discriminator_forward.7} parent=1 // pred_fallthru
      _
    // Predicated region
    $region14: #{discriminator_forward.7} parent=1 // pred_check
      _
    $region15: #{discriminator_forward.7} parent=1 // pred_check_branch
      %20 = sbr.rel (0) target = $region17
    $region16: #{discriminator_forward.7} parent=1 // pred_region
      _
    $region17: #{discriminator_forward.7} parent=1 // pred_fallthru
      _
    // Predicated region
    $region18: #{discriminator_forward.7} parent=1 // pred_check
      _
    $region19: #{discriminator_forward.7} parent=1 // pred_check_branch
      %22 = sbr.rel (0) target = $region21
    $region20: #{discriminator_forward.7} parent=1 // pred_region
      _
    $region21: #{discriminator_forward.7} parent=1 // pred_fallthru
      _
    %v23 = vld [vmem:[%s1] sm:$0xff]
    %v24 = vld [vmem:[%s1 + $0x8] sm:$0xff]
    %v25 = vld [vmem:[%s1 + $0x10] sm:$0xff]
    %v26 = vld [vmem:[%s1 + $0x18] sm:$0xff]
    %v27 = vld [vmem:[%s1 + $0x20] sm:$0xff]
    %v28 = vld [vmem:[%s1 + $0x28] sm:$0xff]
    %v29 = vld [vmem:[%s1 + $0x30] sm:$0xff]
    %v30 = vld [vmem:[%s1 + $0x38] sm:$0xff]
    %v31 = vld [vmem:[%s1 + $0x40] sm:$0xff]
    %v32 = vld [vmem:[%s1 + $0x48] sm:$0xff]
    %v33 = vld [vmem:[%s1 + $0x50] sm:$0xff]
    %v34 = vld [vmem:[%s1 + $0x58] sm:$0xff]
    %v35 = vld [vmem:[%s1 + $0x60] sm:$0xff]
    %v36 = vld [vmem:[%s1 + $0x68] sm:$0xff]
    %v37 = vld [vmem:[%s1 + $0x70] sm:$0xff]
    %v38 = vld [vmem:[%s1 + $0x78] sm:$0xff]
    %v39 = vld [vmem:[%s0] sm:$0xf]
    %v40 = vld [vmem:[%s0 + $0x4] sm:$0xf]
    %v41 = vld [vmem:[%s0 + $0x8] sm:$0xf]
    %v42 = vld [vmem:[%s0 + $0xc] sm:$0xf]
    %v43 = vld [vmem:[%s0 + $0x10] sm:$0xf]
    %v44 = vld [vmem:[%s0 + $0x14] sm:$0xf]
    %v45 = vld [vmem:[%s0 + $0x18] sm:$0xf]
    %v46 = vld [vmem:[%s0 + $0x1c] sm:$0xf]
    %v47 = vld [vmem:[%s0 + $0x20] sm:$0xf]
    %v48 = vld [vmem:[%s0 + $0x24] sm:$0xf]
    %v49 = vld [vmem:[%s0 + $0x28] sm:$0xf]
    %v50 = vld [vmem:[%s0 + $0x2c] sm:$0xf]
    %v51 = vld [vmem:[%s0 + $0x30] sm:$0xf]
    %v52 = vld [vmem:[%s0 + $0x34] sm:$0xf]
    %v53 = vld [vmem:[%s0 + $0x38] sm:$0xf]
    %v54 = vld [vmem:[%s0 + $0x3c] sm:$0xf]
    %v55 = vld [vmem:[%s0 + $0x40] sm:$0xf]
    %v56 = vld [vmem:[%s0 + $0x44] sm:$0xf]
    %v57 = vld [vmem:[%s0 + $0x48] sm:$0xf]
    %v58 = vld [vmem:[%s0 + $0x4c] sm:$0xf]
    %v59 = vld [vmem:[%s0 + $0x50] sm:$0xf]
    %v60 = vld [vmem:[%s0 + $0x54] sm:$0xf]
    %v61 = vld [vmem:[%s0 + $0x58] sm:$0xf]
    %v62 = vld [vmem:[%s0 + $0x5c] sm:$0xf]
    %v63 = vld [vmem:[%s0 + $0x60] sm:$0xf]
    %v64 = vld [vmem:[%s0 + $0x64] sm:$0xf]
    %v65 = vld [vmem:[%s0 + $0x68] sm:$0xf]
    %v66 = vld [vmem:[%s0 + $0x6c] sm:$0xf]
    %v67 = vld [vmem:[%s0 + $0x70] sm:$0xf]
    %v68 = vld [vmem:[%s0 + $0x74] sm:$0xf]
    %v69 = vld [vmem:[%s0 + $0x78] sm:$0xf]
    %v70 = vld [vmem:[%s0 + $0x7c] sm:$0xf]
    %v71 = vld [vmem:[%s0 + $0x80] sm:$0xf]
    %v72 = vld [vmem:[%s0 + $0x84] sm:$0xf]
    %v73 = vld [vmem:[%s0 + $0x88] sm:$0xf]
    %v74 = vld [vmem:[%s0 + $0x8c] sm:$0xf]
    %v75 = vld [vmem:[%s0 + $0x90] sm:$0xf]
    %v76 = vld [vmem:[%s0 + $0x94] sm:$0xf]
    %v77 = vld [vmem:[%s0 + $0x98] sm:$0xf]
    %v78 = vld [vmem:[%s0 + $0x9c] sm:$0xf]
    %v79 = vld [vmem:[%s0 + $0xa0] sm:$0xf]
    %v80 = vld [vmem:[%s0 + $0xa4] sm:$0xf]
    %v81 = vld [vmem:[%s0 + $0xa8] sm:$0xf]
    %v82 = vld [vmem:[%s0 + $0xac] sm:$0xf]
    %v83 = vld [vmem:[%s0 + $0xb0] sm:$0xf]
    %v84 = vld [vmem:[%s0 + $0xb4] sm:$0xf]
    %v85 = vld [vmem:[%s0 + $0xb8] sm:$0xf]
    %v86 = vld [vmem:[%s0 + $0xbc] sm:$0xf]
    %v87 = vld [vmem:[%s0 + $0xc0] sm:$0xf]
    %v88 = vld [vmem:[%s0 + $0xc4] sm:$0xf]
    %v89 = vld [vmem:[%s0 + $0xc8] sm:$0xf]
    %v90 = vld [vmem:[%s0 + $0xcc] sm:$0xf]
    %v91 = vld [vmem:[%s0 + $0xd0] sm:$0xf]
    %v92 = vld [vmem:[%s0 + $0xd4] sm:$0xf]
    %v93 = vld [vmem:[%s0 + $0xd8] sm:$0xf]
    %v94 = vld [vmem:[%s0 + $0xdc] sm:$0xf]
    %v95 = vld [vmem:[%s0 + $0xe0] sm:$0xf]
    %v96 = vld [vmem:[%s0 + $0xe4] sm:$0xf]
    %v97 = vld [vmem:[%s0 + $0xe8] sm:$0xf]
    %v98 = vld [vmem:[%s0 + $0xec] sm:$0xf]
    %v99 = vld [vmem:[%s0 + $0xf0] sm:$0xf]
    %v100 = vld [vmem:[%s0 + $0xf4] sm:$0xf]
    %v101 = vld [vmem:[%s0 + $0xf8] sm:$0xf]
    %v102 = vld [vmem:[%s0 + $0xfc] sm:$0xf]
    %v103 = vld [vmem:[%s2] sm:$0xff]
    %v104 = vld [vmem:[%s2 + $0x8] sm:$0xff]
    %v105 = vld [vmem:[%s2 + $0x10] sm:$0xff]
    %v106 = vld [vmem:[%s2 + $0x18] sm:$0xff]
    %v107 = vld [vmem:[%s2 + $0x20] sm:$0xff]
    %v108 = vld [vmem:[%s2 + $0x28] sm:$0xff]
    %v109 = vld [vmem:[%s2 + $0x30] sm:$0xff]
    %v110 = vld [vmem:[%s2 + $0x38] sm:$0xff]
    %112 = vset.pattern.permute.xlu0 0
    %113 = vperm.xlu0 %112, %v103
    %v114 = vpop.permute.xlu0 %113
    %117 = vset.pattern.permute.xlu0 0
    %118 = vperm.xlu0 %117, %v104
    %v119 = vpop.permute.xlu0 %118
    %122 = vset.pattern.permute.xlu0 0
    %123 = vperm.xlu0 %122, %v105
    %v124 = vpop.permute.xlu0 %123
    %127 = vset.pattern.permute.xlu0 0
    %128 = vperm.xlu0 %127, %v106
    %v129 = vpop.permute.xlu0 %128
    %132 = vset.pattern.permute.xlu0 0
    %133 = vperm.xlu0 %132, %v107
    %v134 = vpop.permute.xlu0 %133
    %137 = vset.pattern.permute.xlu0 0
    %138 = vperm.xlu0 %137, %v108
    %v139 = vpop.permute.xlu0 %138
    %142 = vset.pattern.permute.xlu0 0
    %143 = vperm.xlu0 %142, %v109
    %v144 = vpop.permute.xlu0 %143
    %147 = vset.pattern.permute.xlu0 0
    %148 = vperm.xlu0 %147, %v110
    %v149 = vpop.permute.xlu0 %148
    %v167 = vunpack.c.l.b16 %v23
    %v168 = vunpack.c.h.b16 %v23
    %v169 = vunpack.c.l.b16 %v24
    %v170 = vunpack.c.h.b16 %v24
    %v171 = vunpack.c.l.b16 %v25
    %v172 = vunpack.c.h.b16 %v25
    %v173 = vunpack.c.l.b16 %v26
    %v174 = vunpack.c.h.b16 %v26
    %v175 = vunpack.c.l.b16 %v27
    %v176 = vunpack.c.h.b16 %v27
    %v177 = vunpack.c.l.b16 %v28
    %v178 = vunpack.c.h.b16 %v28
    %v179 = vunpack.c.l.b16 %v29
    %v180 = vunpack.c.h.b16 %v29
    %v181 = vunpack.c.l.b16 %v30
    %v182 = vunpack.c.h.b16 %v30
    %v183 = vunpack.c.l.b16 %v31
    %v184 = vunpack.c.h.b16 %v31
    %v185 = vunpack.c.l.b16 %v32
    %v186 = vunpack.c.h.b16 %v32
    %v187 = vunpack.c.l.b16 %v33
    %v188 = vunpack.c.h.b16 %v33
    %v189 = vunpack.c.l.b16 %v34
    %v190 = vunpack.c.h.b16 %v34
    %v191 = vunpack.c.l.b16 %v35
    %v192 = vunpack.c.h.b16 %v35
    %v193 = vunpack.c.l.b16 %v36
    %v194 = vunpack.c.h.b16 %v36
    %v195 = vunpack.c.l.b16 %v37
    %v196 = vunpack.c.h.b16 %v37
    %v197 = vunpack.c.l.b16 %v38
    %v198 = vunpack.c.h.b16 %v38
    %v199 = vpack.c.b16 %v171, %v167
    %v200 = vpack.c.b16 %v172, %v168
    %v201 = vpack.c.b16 %v173, %v169
    %v202 = vpack.c.b16 %v174, %v170
    %v203 = vpack.c.b16 %v179, %v175
    %v204 = vpack.c.b16 %v180, %v176
    %v205 = vpack.c.b16 %v181, %v177
    %v206 = vpack.c.b16 %v182, %v178
    %v207 = vpack.c.b16 %v187, %v183
    %v208 = vpack.c.b16 %v188, %v184
    %v209 = vpack.c.b16 %v189, %v185
    %v210 = vpack.c.b16 %v190, %v186
    %v211 = vpack.c.b16 %v195, %v191
    %v212 = vpack.c.b16 %v196, %v192
    %v213 = vpack.c.b16 %v197, %v193
    %v214 = vpack.c.b16 %v198, %v194
    %v295 = vunpack.c.l.b16 %v39
    %v296 = vunpack.c.l.b16 %v40
    %v297 = vunpack.c.l.b16 %v41
    %v298 = vunpack.c.l.b16 %v42
    %v299 = vunpack.c.l.b16 %v43
    %v300 = vunpack.c.l.b16 %v44
    %v301 = vunpack.c.l.b16 %v45
    %v302 = vunpack.c.l.b16 %v46
    %v303 = vunpack.c.l.b16 %v47
    %v304 = vunpack.c.l.b16 %v48
    %v305 = vunpack.c.l.b16 %v49
    %v306 = vunpack.c.l.b16 %v50
    %v307 = vunpack.c.l.b16 %v51
    %v308 = vunpack.c.l.b16 %v52
    %v309 = vunpack.c.l.b16 %v53
    %v310 = vunpack.c.l.b16 %v54
    %v311 = vunpack.c.l.b16 %v55
    %v312 = vunpack.c.l.b16 %v56
    %v313 = vunpack.c.l.b16 %v57
    %v314 = vunpack.c.l.b16 %v58
    %v315 = vunpack.c.l.b16 %v59
    %v316 = vunpack.c.l.b16 %v60
    %v317 = vunpack.c.l.b16 %v61
    %v318 = vunpack.c.l.b16 %v62
    %v319 = vunpack.c.l.b16 %v63
    %v320 = vunpack.c.l.b16 %v64
    %v321 = vunpack.c.l.b16 %v65
    %v322 = vunpack.c.l.b16 %v66
    %v323 = vunpack.c.l.b16 %v67
    %v324 = vunpack.c.l.b16 %v68
    %v325 = vunpack.c.l.b16 %v69
    %v326 = vunpack.c.l.b16 %v70
    %v327 = vunpack.c.l.b16 %v71
    %v328 = vunpack.c.l.b16 %v72
    %v329 = vunpack.c.l.b16 %v73
    %v330 = vunpack.c.l.b16 %v74
    %v331 = vunpack.c.l.b16 %v75
    %v332 = vunpack.c.l.b16 %v76
    %v333 = vunpack.c.l.b16 %v77
    %v334 = vunpack.c.l.b16 %v78
    %v335 = vunpack.c.l.b16 %v79
    %v336 = vunpack.c.l.b16 %v80
    %v337 = vunpack.c.l.b16 %v81
    %v338 = vunpack.c.l.b16 %v82
    %v339 = vunpack.c.l.b16 %v83
    %v340 = vunpack.c.l.b16 %v84
    %v341 = vunpack.c.l.b16 %v85
    %v342 = vunpack.c.l.b16 %v86
    %v343 = vunpack.c.l.b16 %v87
    %v344 = vunpack.c.l.b16 %v88
    %v345 = vunpack.c.l.b16 %v89
    %v346 = vunpack.c.l.b16 %v90
    %v347 = vunpack.c.l.b16 %v91
    %v348 = vunpack.c.l.b16 %v92
    %v349 = vunpack.c.l.b16 %v93
    %v350 = vunpack.c.l.b16 %v94
    %v351 = vunpack.c.l.b16 %v95
    %v352 = vunpack.c.l.b16 %v96
    %v353 = vunpack.c.l.b16 %v97
    %v354 = vunpack.c.l.b16 %v98
    %v355 = vunpack.c.l.b16 %v99
    %v356 = vunpack.c.l.b16 %v100
    %v357 = vunpack.c.l.b16 %v101
    %v358 = vunpack.c.l.b16 %v102
    %v359 = vpack.c.b16 %v296, %v295
    %v360 = vpack.c.b16 %v298, %v297
    %v361 = vpack.c.b16 %v300, %v299
    %v362 = vpack.c.b16 %v302, %v301
    %v363 = vpack.c.b16 %v304, %v303
    %v364 = vpack.c.b16 %v306, %v305
    %v365 = vpack.c.b16 %v308, %v307
    %v366 = vpack.c.b16 %v310, %v309
    %v367 = vpack.c.b16 %v312, %v311
    %v368 = vpack.c.b16 %v314, %v313
    %v369 = vpack.c.b16 %v316, %v315
    %v370 = vpack.c.b16 %v318, %v317
    %v371 = vpack.c.b16 %v320, %v319
    %v372 = vpack.c.b16 %v322, %v321
    %v373 = vpack.c.b16 %v324, %v323
    %v374 = vpack.c.b16 %v326, %v325
    %v375 = vpack.c.b16 %v328, %v327
    %v376 = vpack.c.b16 %v330, %v329
    %v377 = vpack.c.b16 %v332, %v331
    %v378 = vpack.c.b16 %v334, %v333
    %v379 = vpack.c.b16 %v336, %v335
    %v380 = vpack.c.b16 %v338, %v337
    %v381 = vpack.c.b16 %v340, %v339
    %v382 = vpack.c.b16 %v342, %v341
    %v383 = vpack.c.b16 %v344, %v343
    %v384 = vpack.c.b16 %v346, %v345
    %v385 = vpack.c.b16 %v348, %v347
    %v386 = vpack.c.b16 %v350, %v349
    %v387 = vpack.c.b16 %v352, %v351
    %v388 = vpack.c.b16 %v354, %v353
    %v389 = vpack.c.b16 %v356, %v355
    %v390 = vpack.c.b16 %v358, %v357
    %423 = vmatpush.bf16.msra.mxu0 %v366
    %424 = vmatpush.bf16.msra.mxu0 %v365
    %425 = vmatpush.bf16.msra.mxu0 %v364
    %426 = vmatpush.bf16.msra.mxu0 %v363
    %427 = vmatpush.bf16.msra.mxu0 %v362
    %428 = vmatpush.bf16.msra.mxu0 %v361
    %429 = vmatpush.bf16.msra.mxu0 %v360
    %430 = vmatpush.bf16.msra.mxu0 %v359
    %431 = vmatmul.bf16.gmra.mxu0 %v199
    %v432 = vpop.f32.mrf.mxu0
    %v433 = vadd.f32 %v114, %v432
    %v434 = vpop.f32.mrf.mxu0
    %v435 = vadd.f32 %v119, %v434
    %436 = vmatmul.bf16.gmra.mxu0 %v203
    %v437 = vpop.f32.mrf.mxu0
    %v438 = vadd.f32 %v124, %v437
    %v439 = vpop.f32.mrf.mxu0
    %v440 = vadd.f32 %v129, %v439
    %441 = vmatmul.bf16.gmra.mxu0 %v207
    %v442 = vpop.f32.mrf.mxu0
    %v443 = vadd.f32 %v134, %v442
    %v444 = vpop.f32.mrf.mxu0
    %v445 = vadd.f32 %v139, %v444
    %446 = vmatmul.bf16.gmra.mxu0 %v211
    %v447 = vpop.f32.mrf.mxu0
    %v448 = vadd.f32 %v144, %v447
    %v449 = vpop.f32.mrf.mxu0
    %v450 = vadd.f32 %v149, %v449
    %451 = vdwg.mxu0
    %452 = vmatpush.bf16.msra.mxu0 %v374
    %453 = vmatpush.bf16.msra.mxu0 %v373
    %454 = vmatpush.bf16.msra.mxu0 %v372
    %455 = vmatpush.bf16.msra.mxu0 %v371
    %456 = vmatpush.bf16.msra.mxu0 %v370
    %457 = vmatpush.bf16.msra.mxu0 %v369
    %458 = vmatpush.bf16.msra.mxu0 %v368
    %459 = vmatpush.bf16.msra.mxu0 %v367
    %460 = vmatmul.bf16.gmra.mxu0 %v200
    %v461 = vpop.f32.mrf.mxu0
    %v462 = vadd.f32 %v433, %v461
    %v463 = vpop.f32.mrf.mxu0
    %v464 = vadd.f32 %v435, %v463
    %465 = vmatmul.bf16.gmra.mxu0 %v204
    %v466 = vpop.f32.mrf.mxu0
    %v467 = vadd.f32 %v438, %v466
    %v468 = vpop.f32.mrf.mxu0
    %v469 = vadd.f32 %v440, %v468
    %470 = vmatmul.bf16.gmra.mxu0 %v208
    %v471 = vpop.f32.mrf.mxu0
    %v472 = vadd.f32 %v443, %v471
    %v473 = vpop.f32.mrf.mxu0
    %v474 = vadd.f32 %v445, %v473
    %475 = vmatmul.bf16.gmra.mxu0 %v212
    %v476 = vpop.f32.mrf.mxu0
    %v477 = vadd.f32 %v448, %v476
    %v478 = vpop.f32.mrf.mxu0
    %v479 = vadd.f32 %v450, %v478
    %480 = vdwg.mxu0
    %481 = vmatpush.bf16.msra.mxu0 %v382
    %482 = vmatpush.bf16.msra.mxu0 %v381
    %483 = vmatpush.bf16.msra.mxu0 %v380
    %484 = vmatpush.bf16.msra.mxu0 %v379
    %485 = vmatpush.bf16.msra.mxu0 %v378
    %486 = vmatpush.bf16.msra.mxu0 %v377
    %487 = vmatpush.bf16.msra.mxu0 %v376
    %488 = vmatpush.bf16.msra.mxu0 %v375
    %489 = vmatmul.bf16.gmra.mxu0 %v201
    %v490 = vpop.f32.mrf.mxu0
    %v491 = vadd.f32 %v462, %v490
    %v492 = vpop.f32.mrf.mxu0
    %v493 = vadd.f32 %v464, %v492
    %494 = vmatmul.bf16.gmra.mxu0 %v205
    %v495 = vpop.f32.mrf.mxu0
    %v496 = vadd.f32 %v467, %v495
    %v497 = vpop.f32.mrf.mxu0
    %v498 = vadd.f32 %v469, %v497
    %499 = vmatmul.bf16.gmra.mxu0 %v209
    %v500 = vpop.f32.mrf.mxu0
    %v501 = vadd.f32 %v472, %v500
    %v502 = vpop.f32.mrf.mxu0
    %v503 = vadd.f32 %v474, %v502
    %504 = vmatmul.bf16.gmra.mxu0 %v213
    %v505 = vpop.f32.mrf.mxu0
    %v506 = vadd.f32 %v477, %v505
    %v507 = vpop.f32.mrf.mxu0
    %v508 = vadd.f32 %v479, %v507
    %509 = vdwg.mxu0
    %510 = vmatpush.bf16.msra.mxu0 %v390
    %511 = vmatpush.bf16.msra.mxu0 %v389
    %512 = vmatpush.bf16.msra.mxu0 %v388
    %513 = vmatpush.bf16.msra.mxu0 %v387
    %514 = vmatpush.bf16.msra.mxu0 %v386
    %515 = vmatpush.bf16.msra.mxu0 %v385
    %516 = vmatpush.bf16.msra.mxu0 %v384
    %517 = vmatpush.bf16.msra.mxu0 %v383
    %518 = vmatmul.bf16.gmra.mxu0 %v202
    %v519 = vpop.f32.mrf.mxu0
    %v520 = vadd.f32 %v491, %v519
    %v521 = vpop.f32.mrf.mxu0
    %v522 = vadd.f32 %v493, %v521
    %523 = vmatmul.bf16.gmra.mxu0 %v206
    %v524 = vpop.f32.mrf.mxu0
    %v525 = vadd.f32 %v496, %v524
    %v526 = vpop.f32.mrf.mxu0
    %v527 = vadd.f32 %v498, %v526
    %528 = vmatmul.bf16.gmra.mxu0 %v210
    %v529 = vpop.f32.mrf.mxu0
    %v530 = vadd.f32 %v501, %v529
    %v531 = vpop.f32.mrf.mxu0
    %v532 = vadd.f32 %v503, %v531
    %533 = vmatmul.bf16.gmra.mxu0 %v214
    %v534 = vpop.f32.mrf.mxu0
    %v535 = vadd.f32 %v506, %v534
    %v536 = vpop.f32.mrf.mxu0
    %v537 = vadd.f32 %v508, %v536
    %538 = vdwg.mxu0
    %vm539 = vcmp.ge.f32.partialorder %v520, 0.0
    %vm540 = vcmp.ge.f32.partialorder %v522, 0.0
    %vm541 = vcmp.ge.f32.partialorder %v525, 0.0
    %vm542 = vcmp.ge.f32.partialorder %v527, 0.0
    %vm543 = vcmp.ge.f32.partialorder %v530, 0.0
    %vm544 = vcmp.ge.f32.partialorder %v532, 0.0
    %vm545 = vcmp.ge.f32.partialorder %v535, 0.0
    %vm546 = vcmp.ge.f32.partialorder %v537, 0.0
    %v547 = vmul.f32 %v520, 0.2
    %v548 = vmul.f32 %v522, 0.2
    %v549 = vmul.f32 %v525, 0.2
    %v550 = vmul.f32 %v527, 0.2
    %v551 = vmul.f32 %v530, 0.2
    %v552 = vmul.f32 %v532, 0.2
    %v553 = vmul.f32 %v535, 0.2
    %v554 = vmul.f32 %v537, 0.2
    %v555 = vsel %vm539, %v520, %v547
    %v556 = vsel %vm540, %v522, %v548
    %v557 = vsel %vm541, %v525, %v549
    %v558 = vsel %vm542, %v527, %v550
    %v559 = vsel %vm543, %v530, %v551
    %v560 = vsel %vm544, %v532, %v552
    %v561 = vsel %vm545, %v535, %v553
    %v562 = vsel %vm546, %v537, %v554
    %vm563 = vcmask 261120
    %564 = vst.msk [vmem:[%s5] sm:$0xff] %vm563, %v555
    %565 = vst.msk [vmem:[%s5 + $0x8] sm:$0xff] %vm563, %v556
    %566 = vst.msk [vmem:[%s5 + $0x10] sm:$0xff] %vm563, %v557
    %567 = vst.msk [vmem:[%s5 + $0x18] sm:$0xff] %vm563, %v558
    %568 = vst.msk [vmem:[%s5 + $0x20] sm:$0xff] %vm563, %v559
    %569 = vst.msk [vmem:[%s5 + $0x28] sm:$0xff] %vm563, %v560
    %570 = vst.msk [vmem:[%s5 + $0x30] sm:$0xff] %vm563, %v561
    %571 = vst.msk [vmem:[%s5 + $0x38] sm:$0xff] %vm563, %v562
    %v572 = vld [vmem:[%s3] sm:$0xff]
    %v573 = vld [vmem:[%s3 + $0x8] sm:$0xff]
    %v574 = vld [vmem:[%s3 + $0x10] sm:$0xff]
    %v575 = vld [vmem:[%s3 + $0x18] sm:$0xff]
    %v576 = vld [vmem:[%s3 + $0x20] sm:$0xff]
    %v577 = vld [vmem:[%s3 + $0x28] sm:$0xff]
    %v578 = vld [vmem:[%s3 + $0x30] sm:$0xff]
    %v579 = vld [vmem:[%s3 + $0x38] sm:$0xff]
    %v580 = vmul.f32 %v555, %v572
    %v581 = vmul.f32 %v556, %v573
    %v582 = vmul.f32 %v557, %v574
    %v583 = vmul.f32 %v558, %v575
    %v584 = vmul.f32 %v559, %v576
    %v585 = vmul.f32 %v560, %v577
    %v586 = vmul.f32 %v561, %v578
    %v587 = vmul.f32 %v562, %v579
    %v588 = vld [vmem:[%s4] sm:$0xff]
    %v589 = vld [vmem:[%s4 + $0x8] sm:$0xff]
    %v590 = vld [vmem:[%s4 + $0x10] sm:$0xff]
    %v591 = vld [vmem:[%s4 + $0x18] sm:$0xff]
    %v593 = vsel %vm563, %v580, 0
    %v596 = vsel %vm563, %v581, 0
    %v599 = vsel %vm563, %v582, 0
    %v602 = vsel %vm563, %v583, 0
    %v605 = vsel %vm563, %v584, 0
    %v608 = vsel %vm563, %v585, 0
    %v611 = vsel %vm563, %v586, 0
    %v614 = vsel %vm563, %v587, 0
    %616 = vmatpush.msra.mxu0 0.0
    %617 = vmatpush.msra.mxu0 0.0
    %618 = vmatpush.msra.mxu0 0.0
    %619 = vmatpush.msra.mxu0 0.0
    %620 = vmatpush.msra.mxu0 0.0
    %621 = vmatpush.msra.mxu0 0.0
    %622 = vmatpush.msra.mxu0 0.0
    %623 = vmatpush.msra.mxu0 0.0
    %624 = vmatpush.msra.mxu0 0.0
    %625 = vmatpush.msra.mxu0 0.0
    %626 = vmatpush.msra.mxu0 0.0
    %627 = vmatpush.msra.mxu0 0.0
    %628 = vmatpush.msra.mxu0 %v591
    %629 = vmatpush.msra.mxu0 %v590
    %630 = vmatpush.msra.mxu0 %v589
    %631 = vmatpush.msra.mxu0 %v588
    %632 = vmatmul.f32.gmra.mxu0 %v593
    %v633 = vpop.f32.mrf.mxu0
    %v634 = vadd.f32 0.0, %v633
    %635 = vmatmul.f32.gmra.mxu0 %v596
    %v636 = vpop.f32.mrf.mxu0
    %v637 = vadd.f32 0.0, %v636
    %638 = vmatmul.f32.gmra.mxu0 %v599
    %v639 = vpop.f32.mrf.mxu0
    %v640 = vadd.f32 0.0, %v639
    %641 = vmatmul.f32.gmra.mxu0 %v602
    %v642 = vpop.f32.mrf.mxu0
    %v643 = vadd.f32 0.0, %v642
    %644 = vmatmul.f32.gmra.mxu0 %v605
    %v645 = vpop.f32.mrf.mxu0
    %v646 = vadd.f32 0.0, %v645
    %647 = vmatmul.f32.gmra.mxu0 %v608
    %v648 = vpop.f32.mrf.mxu0
    %v649 = vadd.f32 0.0, %v648
    %650 = vmatmul.f32.gmra.mxu0 %v611
    %v651 = vpop.f32.mrf.mxu0
    %v652 = vadd.f32 0.0, %v651
    %653 = vmatmul.f32.gmra.mxu0 %v614
    %v654 = vpop.f32.mrf.mxu0
    %v655 = vadd.f32 0.0, %v654
    %656 = vdwg.mxu0
    %vm657 = vcmask 15360
    %v658 = vsel %vm657, %v634, 0.0
    %v659 = vsel %vm657, %v637, 0.0
    %v660 = vadd.f32 %v658, %v659
    %v661 = vsel %vm657, %v640, 0.0
    %v662 = vadd.f32 %v660, %v661
    %v663 = vsel %vm657, %v643, 0.0
    %v664 = vadd.f32 %v662, %v663
    %v665 = vsel %vm657, %v646, 0.0
    %v666 = vadd.f32 %v664, %v665
    %v667 = vsel %vm657, %v649, 0.0
    %v668 = vadd.f32 %v666, %v667
    %v669 = vsel %vm657, %v652, 0.0
    %v670 = vadd.f32 %v668, %v669
    %v671 = vsel %vm657, %v655, 0.0
    %v672 = vadd.f32 %v670, %v671
    %v673 = vrot.slane %v672, 4
    %v674 = vadd.f32 %v672, %v673
    %v675 = vrot.slane %v674, 2
    %v676 = vadd.f32 %v674, %v675
    %v677 = vrot.slane %v676, 1
    %v678 = vadd.f32 %v676, %v677
    %v679 = vxor.u32 %v678, 2147483648
    %v680 = vmul.f32 %v679, 1.442695
    %v681 = vpow.pop %v680
    %v682 = vadd.f32 %v681, 1.0
    %v683 = vrcp.pop %v682
    %v684 = vmul.f32 %v682, %v683
    %v685 = vsub.f32 1.0, %v684
    %v686 = vmul.f32 %v683, %v685
    %v687 = vadd.f32 %v683, %v686
    %vm688 = vweird.f32 %v682
    %vm689 = vweird.f32 %v683
    %vm690 = vmor %vm688, %vm689
    %v691 = vsel %vm690, %v683, %v687
    %v692 = vand.u32 2147483647, %v682
    %vm693 = vcmp.eq.f32.partialorder %v692, 8.507059e+37
    %v694 = vand.u32 %v682, 2147483648
    %v695 = vor.u32 1.1754944e-38, %v694
    %v696 = vsel %vm693, %v695, %v691
    %v697 = vmul.f32 1.0, %v696
    %vm698 = vcmask 8192
    %699 = vst.msk [vmem:[#allocation2] sm:$0x1] %vm698, %v697
    // Predicated region
    $region22: #{discriminator_forward.7} parent=1 // pred_check
      _
    $region23: #{discriminator_forward.7} parent=1 // pred_check_branch
      %701 = sbr.rel (0) target = $region25
    $region24: #{discriminator_forward.7} parent=1 // pred_region
      _
    $region25: #{discriminator_forward.7} parent=1 // pred_fallthru
      _
    // Predicated region
    $region26: #{discriminator_forward.7} parent=1 // pred_check
      _
    $region27: #{discriminator_forward.7} parent=1 // pred_check_branch
      %703 = sbr.rel (0) target = $region29
    $region28: #{discriminator_forward.7} parent=1 // pred_region
      %705 = vsyncadd [#allocation3], 0
      %s707 = sshll.u32 [#allocation2], 4
      %s708 = int_to_ptr.vmem [resolvable:$true] %s707
      %s709 = sshll.u32 %s6, 4
      %s710 = int_to_ptr.hbm [resolvable:$true] %s709
      %712 = dma.vmem_to_hbm [thread:$0]  %s708, 16, %s710, [#allocation3]
    $region29: #{discriminator_forward.7} parent=1 // pred_fallthru
      _
    // Predicated region
    $region30: #{discriminator_forward.7} parent=1 // pred_check
      _
    $region31: #{discriminator_forward.7} parent=1 // pred_check_branch
      %714 = sbr.rel (0) target = $region33
    $region32: #{discriminator_forward.7} parent=1 // pred_region
      _
    $region33: #{discriminator_forward.7} parent=1 // pred_fallthru
      _
    // Predicated region
    $region34: #{discriminator_forward.7} parent=1 // pred_check
      _
    $region35: #{discriminator_forward.7} parent=1 // pred_check_branch
      %716 = sbr.rel (0) target = $region37
    $region36: #{discriminator_forward.7} parent=1 // pred_region
      %718 = dma.done [#allocation3], 16
    $region37: #{discriminator_forward.7} parent=1 // pred_fallthru
      _
    %719 = vsyncpa [#allocation3], 1

</llo_original>
